<compile_context>
chip_gen: v7x
topology: tpu7x:2x2x1
jax: 0.10.0
libtpu: 0.0.40
codegen_flags: <defaults>
</compile_context>

<pallas_src>
import functools
import math

import numpy as np
import jax
import jax.numpy as jnp
from jax.experimental import pallas as pl
from jax.experimental.pallas import tpu as pltpu


def make_conv_masks(height, width, n_pad):
    """(11, n_pad, 1) f32 per-token-slot masks.

    rows 0..8 : validity of 3x3 tap t (dy=t//3-1, dx=t%3-1) at each token slot
    row  9    : real-token mask (cls + image tokens; 0 on padded slots)
    row 10    : image-token mask (0 on cls and padded slots)

    Token slots per batch element: 0 = cls, 1 + y*width + x = image token (y, x),
    slots hw+1 .. n_pad-1 = zero padding (added only to make the sublane dim a
    multiple of 8).
    """
    hw = height * width
    m = np.zeros((11, n_pad, 1), np.float32)
    for t in range(9):
        dy, dx = t // 3 - 1, t % 3 - 1
        for y in range(height):
            for x in range(width):
                if 0 <= y + dy < height and 0 <= x + dx < width:
                    m[t, 1 + y * width + x, 0] = 1.0
    m[9, :hw + 1, 0] = 1.0
    m[10, 1:hw + 1, 0] = 1.0
    return jnp.asarray(m)


def _conv_attention_kernel(x_ref, masks_ref,
                           wd1_ref, bd1_ref, wp1_ref, bp1_ref,
                           wq_ref, wk_ref, wv_ref,
                           wd2_ref, bd2_ref, wp2_ref, bp2_ref,
                           wo_ref, bo_ref, o_ref, *, width, compute_dtype):
    """One grid step = `block_b` batch elements, all heads fused in the lane axis.

    x_ref    : (Bt, Np, D)     tokens (cls + H*W image tokens + zero pad rows)
    masks_ref: (11, Np, 1)     tap-validity / token-valid / is-image masks
    wd*_ref  : (9, 1, C)       depthwise 3x3 weights, tap-major (f32, VPU path)
    bd*_ref  : (1, C)          depthwise bias
    wp*_ref  : (C, C)          pointwise 1x1 weights (in, out) — MXU path
    bp*_ref  : (1, C)          pointwise bias
    wq/wk/wv : (D, inner)      q/k/v projections (bias-free) — MXU path
    wo_ref   : (inner, D)      output projection; bo_ref: (1, D)
    o_ref    : (Bt, Np, D)     output tokens
    """
    f32 = jnp.float32
    bt, npad, d = x_ref.shape
    rows = bt * npad
    # halo large enough for the biggest tap shift (width+1), rounded to the
    # f32 sublane tile so the halo concatenation stays tile-aligned.
    pad_amt = ((width + 1 + 7) // 8) * 8

    is_img = masks_ref[10] > 0.5          # (Np, 1) bool, broadcasts over (Bt, Np, C)
    tok_valid = masks_ref[9]              # (Np, 1) f32

    def mm(a3, w_ref):
        """(Bt, Np, K) x (K, E) -> (Bt, Np, E); f32 accumulation on the MXU.

        Np % 8 == 0 so the (Bt, Np, K) <-> (Bt*Np, K) reshapes are free relabels;
        operands are cast to `compute_dtype` (bf16 on v6e/v7x) right at the dot.
        """
        k_dim = a3.shape[-1]
        a2 = a3.reshape(rows, k_dim).astype(compute_dtype)
        out2 = jnp.dot(a2, w_ref[...], preferred_element_type=f32)
        return out2.reshape(bt, npad, w_ref.shape[1])

    def sep_conv(t3, wd_ref, bd_ref, wp_ref, bp_ref):
        """SepConv2d on the flat token layout: depthwise 3x3 as 8 token-axis
        shifts (XLU) * per-channel tap weights * (Np,1) validity masks (VPU),
        then pointwise 1x1 as a dense channel matmul (MXU)."""
        c = t3.shape[-1]
        halo = jnp.zeros((bt, pad_amt, c), f32)
        t3p = jnp.concatenate([halo, t3, halo], axis=1)     # tile-aligned concat
        acc = t3 * wd_ref[4]                                # centre tap: no shift/mask
        for t in range(9):                                  # static 9-tap unroll
            if t == 4:
                continue
            dy, dx = t // 3 - 1, t % 3 - 1
            delta = dy * width + dx
            start = pad_amt + delta
            shifted = t3p[:, start:start + npad, :]         # token shift by `delta`
            acc = acc + (shifted * masks_ref[t]) * wd_ref[t]
        acc = acc + bd_ref[...]
        return mm(acc, wp_ref) + bp_ref[...]                # pointwise 1x1 + bias

    x3 = x_ref[...].astype(f32)                             # (Bt, Np, D)

    # 1. input SepConv2d on image tokens; residual add (cls doubled, pads stay 0)
    conv1 = sep_conv(x3, wd1_ref, bd1_ref, wp1_ref, bp1_ref)
    x3 = x3 + jnp.where(is_img, conv1, x3)

    # 2. q/k/v projections — three lane-aligned matmuls, bias-free
    q3 = mm(x3, wq_ref)
    k3 = mm(x3, wk_ref)
    v3 = mm(x3, wv_ref)

    # 3. softmax(k^T) over tokens (per batch element); only diag(softmax(k^T) @ v)
    #    is needed -> per-column masked sums, no (N,N) logits.
    m = jnp.max(k3, axis=1, keepdims=True)                  # (Bt, 1, inner) stabilizer
    e = jnp.exp(k3 - m) * tok_valid                         # mask padded token rows
    denom = jnp.sum(e, axis=1, keepdims=True)               # (Bt, 1, inner)
    num = jnp.sum(e * v3, axis=1, keepdims=True)            # (Bt, 1, inner)
    ctx_diag = num * pl.reciprocal(denom, approx=True)      # EUP reciprocal

    # 4. SepConv2d on the value image tokens (flat (h d) channel layout)
    conv2 = sep_conv(v3, wd2_ref, bd2_ref, wp2_ref, bp2_ref)
    v_new = jnp.where(is_img, conv2, v3)                    # cls/pad rows keep v

    # 5. out = q * (v_conv + diag(context)); output Linear + bias (Dropout p=0)
    out3 = q3 * (v_new + ctx_diag)
    o_ref[...] = (mm(out3, wo_ref) + bo_ref[...]).astype(o_ref.dtype)


def conv_attention_pallas(x, wd1, bd1, wp1, bp1, wq, wk, wv, wd2, bd2, wp2, bp2,
                          wo, bo, *, height, width, block_b=None,
                          compute_dtype=jnp.float32):
    """x: (B, N, D) with N = height*width + 1.  Weights in kernel layout."""
    b, n, d = x.shape
    inner = wq.shape[1]
    assert n == height * width + 1
    assert inner == d, "attn_depthwiseconv requires heads*dim_head == dim"

    n_pad = ((n + 7) // 8) * 8                 # sublane-tile aligned token count
    if block_b is None:
        # enough rows per step to fill MXU rows, capped by the batch size
        block_b = max(1, min(b, max(1, 512 // n_pad)))
        while b % block_b:
            block_b -= 1
    assert b % block_b == 0

    masks = make_conv_masks(height, width, n_pad)
    x_pad = jnp.pad(x, ((0, 0), (0, n_pad - n), (0, 0)))
    cast = lambda w: w.astype(compute_dtype)   # MXU operands only

    const2 = lambda shape: pl.BlockSpec(shape, lambda i: (0, 0))
    const3 = lambda shape: pl.BlockSpec(shape, lambda i: (0, 0, 0))

    grid_spec = pltpu.PrefetchScalarGridSpec(
        num_scalar_prefetch=0,
        grid=(b // block_b,),
        in_specs=[
            pl.BlockSpec((block_b, n_pad, d), lambda i: (i, 0, 0)),   # x
            const3((11, n_pad, 1)),                                   # masks
            const3((9, 1, d)), const2((1, d)),                        # wd1, bd1
            const2((d, d)), const2((1, d)),                           # wp1, bp1
            const2((d, inner)), const2((d, inner)), const2((d, inner)),  # wq, wk, wv
            const3((9, 1, inner)), const2((1, inner)),                # wd2, bd2
            const2((inner, inner)), const2((1, inner)),               # wp2, bp2
            const2((inner, d)), const2((1, d)),                       # wo, bo
        ],
        out_specs=pl.BlockSpec((block_b, n_pad, d), lambda i: (i, 0, 0)),
    )

    out = pl.pallas_call(
        functools.partial(_conv_attention_kernel, width=width,
                          compute_dtype=compute_dtype),
        out_shape=jax.ShapeDtypeStruct((b, n_pad, d), jnp.float32),
        grid_spec=grid_spec,
        compiler_params=pltpu.CompilerParams(
            dimension_semantics=("parallel",),       # batch blocks -> megacore split
            vmem_limit_bytes=32 * 1024 * 1024),
    )(x_pad, masks,
      wd1, bd1, cast(wp1), bp1,
      cast(wq), cast(wk), cast(wv),
      wd2, bd2, cast(wp2), bp2,
      cast(wo), bo)
    return out[:, :n]


def conv_attention_reference(x, wd1, bd1, wp1, bp1, wqkv, wd2, bd2, wp2, bp2,
                             wo, bo, *, heads, height, width):
    """Pure-JAX transliteration of the PyTorch forward (for correctness check)."""
    hp = jax.lax.Precision.HIGHEST
    b, n, d = x.shape
    inner = wqkv.shape[1] // 3
    dh = inner // heads

    def sep_conv(img, wd, bd, wp, bp):
        out = jax.lax.conv_general_dilated(
            img, wd, window_strides=(1, 1), padding=((1, 1), (1, 1)),
            dimension_numbers=('NCHW', 'OIHW', 'NCHW'),
            feature_group_count=img.shape[1], precision=hp)
        out = out + bd[None, :, None, None]
        out = jnp.einsum('bchw,oc->bohw', out, wp, precision=hp)
        return out + bp[None, :, None, None]

    cls = x[:, :1]
    img = x[:, 1:].reshape(b, height, width, d).transpose(0, 3, 1, 2)
    img = sep_conv(img, wd1, bd1, wp1, bp1)
    img = img.transpose(0, 2, 3, 1).reshape(b, height * width, d)
    x = x + jnp.concatenate([cls, img], axis=1)

    qkv = jnp.einsum('bnd,de->bne', x, wqkv, precision=hp)
    q, k, v = jnp.split(qkv, 3, axis=-1)
    split_heads = lambda t: t.reshape(b, n, heads, dh).transpose(0, 2, 1, 3)
    q, k, v = map(split_heads, (q, k, v))

    k_t = jax.nn.softmax(k.transpose(0, 1, 3, 2), axis=-1)            # (b,h,dh,N)
    context = jnp.einsum('bhij,bhja->bhia', k_t, v, precision=hp)     # (b,h,dh,dh)
    attn = q * jnp.diagonal(context, axis1=-2, axis2=-1)[:, :, None, :]

    cls_v = v[:, :, :1]
    vt = v[:, :, 1:].reshape(b, heads, height, width, dh)
    vt = vt.transpose(0, 1, 4, 2, 3).reshape(b, heads * dh, height, width)
    vt = sep_conv(vt, wd2, bd2, wp2, bp2)
    vt = vt.reshape(b, heads, dh, height, width).transpose(0, 1, 3, 4, 2)
    vt = vt.reshape(b, heads, height * width, dh)
    v = jnp.concatenate([cls_v, vt], axis=2)

    out = q * v + attn
    out = out.transpose(0, 2, 1, 3).reshape(b, n, inner)
    return jnp.einsum('bni,io->bno', out, wo, precision=hp) + bo


if __name__ == "__main__":
    B = 4
    HEIGHT = WIDTH = 4
    N = HEIGHT * WIDTH + 1            # 1 cls token + 16 image tokens
    DIM = 32
    HEADS, DIM_HEAD = 4, 8            # inner_dim = 32 == DIM (module requirement)
    INNER = HEADS * DIM_HEAD

    key = jax.random.PRNGKey(0)
    ks = jax.random.split(key, 12)

    lim_dw = 1.0 / 3.0                      # depthwise fan_in = 9
    lim_pw = 1.0 / math.sqrt(DIM)
    lim_qkv = 1.0 / math.sqrt(DIM)
    lim_out = 1.0 / math.sqrt(INNER)

    x = jax.random.normal(ks[0], (B, N, DIM), jnp.float32)
    wd1 = jax.random.uniform(ks[1], (DIM, 1, 3, 3), jnp.float32, -lim_dw, lim_dw)
    bd1 = jax.random.uniform(ks[2], (DIM,), jnp.float32, -lim_dw, lim_dw)
    wp1 = jax.random.uniform(ks[3], (DIM, DIM), jnp.float32, -lim_pw, lim_pw)   # (out, in)
    bp1 = jax.random.uniform(ks[4], (DIM,), jnp.float32, -lim_pw, lim_pw)
    wqkv = jax.random.uniform(ks[5], (DIM, 3 * INNER), jnp.float32, -lim_qkv, lim_qkv)
    wd2 = jax.random.uniform(ks[6], (INNER, 1, 3, 3), jnp.float32, -lim_dw, lim_dw)
    bd2 = jax.random.uniform(ks[7], (INNER,), jnp.float32, -lim_dw, lim_dw)
    wp2 = jax.random.uniform(ks[8], (INNER, INNER), jnp.float32, -lim_pw, lim_pw)
    bp2 = jax.random.uniform(ks[9], (INNER,), jnp.float32, -lim_pw, lim_pw)
    wo = jax.random.uniform(ks[10], (INNER, DIM), jnp.float32, -lim_out, lim_out)
    bo = jax.random.uniform(ks[11], (DIM,), jnp.float32, -lim_out, lim_out)

    # kernel-layout weights
    def dw_to_taps(wd):                    # (C,1,3,3) -> (9,1,C), tap-major
        return jnp.transpose(wd[:, 0], (1, 2, 0)).reshape(9, -1)[:, None, :]

    kernel_args = dict(
        wd1=dw_to_taps(wd1), bd1=bd1[None], wp1=wp1.T, bp1=bp1[None],
        wq=wqkv[:, :INNER], wk=wqkv[:, INNER:2 * INNER], wv=wqkv[:, 2 * INNER:],
        wd2=dw_to_taps(wd2), bd2=bd2[None], wp2=wp2.T, bp2=bp2[None],
        wo=wo, bo=bo[None])

    ref = conv_attention_reference(
        x, wd1, bd1, wp1, bp1, wqkv, wd2, bd2, wp2, bp2, wo, bo[None],
        heads=HEADS, height=HEIGHT, width=WIDTH)

    # f32 MXU path (strict check), 2 batch elements per grid step -> grid=(2,)
    out_f32 = conv_attention_pallas(
        x, height=HEIGHT, width=WIDTH, block_b=2,
        compute_dtype=jnp.float32, **kernel_args)
    out_f32 = jax.block_until_ready(out_f32)
    assert out_f32.shape == (B, N, DIM)
    err = float(jnp.max(jnp.abs(out_f32 - ref)))
    assert jnp.allclose(out_f32, ref, atol=1e-3, rtol=1e-3), f"f32 mismatch, max err {err}"

    # bf16 MXU operands (f32 accumulation) — v6e/v7x fast path, looser tolerance
    out_bf16 = conv_attention_pallas(
        x, height=HEIGHT, width=WIDTH, block_b=2,
        compute_dtype=jnp.bfloat16, **kernel_args)
    out_bf16 = jax.block_until_ready(out_bf16)
    err_bf = float(jnp.max(jnp.abs(out_bf16 - ref)))
    assert jnp.allclose(out_bf16, ref, atol=5e-2, rtol=5e-2), f"bf16 mismatch, max err {err_bf}"

    print("KERNEL_OK")
</pallas_src>

<mosaic_0001>
module attributes {stable_mosaic.version = 11 : i64} {
  func.func @_conv_attention_kernel(%arg0: i32, %arg1: memref<2x24x32xf32, #tpu.memory_space<vmem>>, %arg2: memref<11x24x1xf32, #tpu.memory_space<vmem>>, %arg3: memref<9x1x32xf32, #tpu.memory_space<vmem>>, %arg4: memref<1x32xf32, #tpu.memory_space<vmem>>, %arg5: memref<32x32xf32, #tpu.memory_space<vmem>>, %arg6: memref<1x32xf32, #tpu.memory_space<vmem>>, %arg7: memref<32x32xf32, #tpu.memory_space<vmem>>, %arg8: memref<32x32xf32, #tpu.memory_space<vmem>>, %arg9: memref<32x32xf32, #tpu.memory_space<vmem>>, %arg10: memref<9x1x32xf32, #tpu.memory_space<vmem>>, %arg11: memref<1x32xf32, #tpu.memory_space<vmem>>, %arg12: memref<32x32xf32, #tpu.memory_space<vmem>>, %arg13: memref<1x32xf32, #tpu.memory_space<vmem>>, %arg14: memref<32x32xf32, #tpu.memory_space<vmem>>, %arg15: memref<1x32xf32, #tpu.memory_space<vmem>>, %arg16: memref<2x24x32xf32, #tpu.memory_space<vmem>>) attributes {dimension_semantics = [#tpu.dimension_semantics<parallel>], iteration_bounds = array<i64: 2>, scalar_prefetch = 0 : i64, scratch_operands = 0 : i64, tpu.core_type = #tpu.core_type<tc>, window_params = [{transform_indices = @transform_0, window_bounds = array<i64: 2, 24, 32>}, {pipeline_mode = #tpu.pipeline_mode<synchronous>, transform_indices = @transform_1, window_bounds = array<i64: 11, 24, 1>}, {pipeline_mode = #tpu.pipeline_mode<synchronous>, transform_indices = @transform_2, window_bounds = array<i64: 9, 1, 32>}, {pipeline_mode = #tpu.pipeline_mode<synchronous>, transform_indices = @transform_3, window_bounds = array<i64: 1, 32>}, {pipeline_mode = #tpu.pipeline_mode<synchronous>, transform_indices = @transform_4, window_bounds = array<i64: 32, 32>}, {pipeline_mode = #tpu.pipeline_mode<synchronous>, transform_indices = @transform_5, window_bounds = array<i64: 1, 32>}, {pipeline_mode = #tpu.pipeline_mode<synchronous>, transform_indices = @transform_6, window_bounds = array<i64: 32, 32>}, {pipeline_mode = #tpu.pipeline_mode<synchronous>, transform_indices = @transform_7, window_bounds = array<i64: 32, 32>}, {pipeline_mode = #tpu.pipeline_mode<synchronous>, transform_indices = @transform_8, window_bounds = array<i64: 32, 32>}, {pipeline_mode = #tpu.pipeline_mode<synchronous>, transform_indices = @transform_9, window_bounds = array<i64: 9, 1, 32>}, {pipeline_mode = #tpu.pipeline_mode<synchronous>, transform_indices = @transform_10, window_bounds = array<i64: 1, 32>}, {pipeline_mode = #tpu.pipeline_mode<synchronous>, transform_indices = @transform_11, window_bounds = array<i64: 32, 32>}, {pipeline_mode = #tpu.pipeline_mode<synchronous>, transform_indices = @transform_12, window_bounds = array<i64: 1, 32>}, {pipeline_mode = #tpu.pipeline_mode<synchronous>, transform_indices = @transform_13, window_bounds = array<i64: 32, 32>}, {pipeline_mode = #tpu.pipeline_mode<synchronous>, transform_indices = @transform_14, window_bounds = array<i64: 1, 32>}, {transform_indices = @transform_15, window_bounds = array<i64: 2, 24, 32>}]} {
    %c10 = arith.constant 10 : index
    %c0 = arith.constant 0 : index
    %c0_0 = arith.constant 0 : index
    %0 = vector.load %arg2[%c10, %c0, %c0_0] : memref<11x24x1xf32, #tpu.memory_space<vmem>>, vector<1x24x1xf32>
    %1 = vector.shape_cast %0 : vector<1x24x1xf32> to vector<24x1xf32>
    %cst = arith.constant 5.000000e-01 : f32
    %2 = vector.broadcast %cst : f32 to vector<24x1xf32>
    %3 = arith.cmpf ogt, %1, %2 : vector<24x1xf32>
    %c9 = arith.constant 9 : index
    %c0_1 = arith.constant 0 : index
    %c0_2 = arith.constant 0 : index
    %4 = vector.load %arg2[%c9, %c0_1, %c0_2] : memref<11x24x1xf32, #tpu.memory_space<vmem>>, vector<1x24x1xf32>
    %5 = vector.shape_cast %4 : vector<1x24x1xf32> to vector<24x1xf32>
    %c0_3 = arith.constant 0 : index
    %c0_4 = arith.constant 0 : index
    %c0_5 = arith.constant 0 : index
    %6 = vector.load %arg1[%c0_3, %c0_4, %c0_5] : memref<2x24x32xf32, #tpu.memory_space<vmem>>, vector<2x24x32xf32>
    %cst_6 = arith.constant 0.000000e+00 : f32
    %7 = vector.broadcast %cst_6 : f32 to vector<2x8x32xf32>
    %8 = tpu.concatenate %7, %6, %7 in 1 : vector<2x8x32xf32>, vector<2x24x32xf32>, vector<2x8x32xf32> -> vector<2x40x32xf32>
    %c4 = arith.constant 4 : index
    %c0_7 = arith.constant 0 : index
    %c0_8 = arith.constant 0 : index
    %9 = vector.load %arg3[%c4, %c0_7, %c0_8] : memref<9x1x32xf32, #tpu.memory_space<vmem>>, vector<1x1x32xf32>
    %10 = vector.shape_cast %9 : vector<1x1x32xf32> to vector<1x32xf32>
    %11 = vector.shape_cast %10 : vector<1x32xf32> to vector<1x1x32xf32>
    %12 = vector.broadcast %11 : vector<1x1x32xf32> to vector<2x24x32xf32>
    %13 = arith.mulf %6, %12 : vector<2x24x32xf32>
    %14 = vector.extract_strided_slice %8 {offsets = [0, 3, 0], sizes = [2, 24, 32], strides = [1, 1, 1]} : vector<2x40x32xf32> to vector<2x24x32xf32>
    %c0_9 = arith.constant 0 : index
    %c0_10 = arith.constant 0 : index
    %c0_11 = arith.constant 0 : index
    %15 = vector.load %arg2[%c0_9, %c0_10, %c0_11] : memref<11x24x1xf32, #tpu.memory_space<vmem>>, vector<1x24x1xf32>
    %16 = vector.shape_cast %15 : vector<1x24x1xf32> to vector<24x1xf32>
    %17 = vector.shape_cast %16 : vector<24x1xf32> to vector<1x24x1xf32>
    %18 = vector.broadcast %17 : vector<1x24x1xf32> to vector<2x24x32xf32>
    %19 = arith.mulf %14, %18 : vector<2x24x32xf32>
    %c0_12 = arith.constant 0 : index
    %c0_13 = arith.constant 0 : index
    %c0_14 = arith.constant 0 : index
    %20 = vector.load %arg3[%c0_12, %c0_13, %c0_14] : memref<9x1x32xf32, #tpu.memory_space<vmem>>, vector<1x1x32xf32>
    %21 = vector.shape_cast %20 : vector<1x1x32xf32> to vector<1x32xf32>
    %22 = vector.shape_cast %21 : vector<1x32xf32> to vector<1x1x32xf32>
    %23 = vector.broadcast %22 : vector<1x1x32xf32> to vector<2x24x32xf32>
    %24 = arith.mulf %19, %23 : vector<2x24x32xf32>
    %25 = arith.addf %13, %24 : vector<2x24x32xf32>
    %26 = vector.extract_strided_slice %8 {offsets = [0, 4, 0], sizes = [2, 24, 32], strides = [1, 1, 1]} : vector<2x40x32xf32> to vector<2x24x32xf32>
    %c1 = arith.constant 1 : index
    %c0_15 = arith.constant 0 : index
    %c0_16 = arith.constant 0 : index
    %27 = vector.load %arg2[%c1, %c0_15, %c0_16] : memref<11x24x1xf32, #tpu.memory_space<vmem>>, vector<1x24x1xf32>
    %28 = vector.shape_cast %27 : vector<1x24x1xf32> to vector<24x1xf32>
    %29 = vector.shape_cast %28 : vector<24x1xf32> to vector<1x24x1xf32>
    %30 = vector.broadcast %29 : vector<1x24x1xf32> to vector<2x24x32xf32>
    %31 = arith.mulf %26, %30 : vector<2x24x32xf32>
    %c1_17 = arith.constant 1 : index
    %c0_18 = arith.constant 0 : index
    %c0_19 = arith.constant 0 : index
    %32 = vector.load %arg3[%c1_17, %c0_18, %c0_19] : memref<9x1x32xf32, #tpu.memory_space<vmem>>, vector<1x1x32xf32>
    %33 = vector.shape_cast %32 : vector<1x1x32xf32> to vector<1x32xf32>
    %34 = vector.shape_cast %33 : vector<1x32xf32> to vector<1x1x32xf32>
    %35 = vector.broadcast %34 : vector<1x1x32xf32> to vector<2x24x32xf32>
    %36 = arith.mulf %31, %35 : vector<2x24x32xf32>
    %37 = arith.addf %25, %36 : vector<2x24x32xf32>
    %38 = vector.extract_strided_slice %8 {offsets = [0, 5, 0], sizes = [2, 24, 32], strides = [1, 1, 1]} : vector<2x40x32xf32> to vector<2x24x32xf32>
    %c2 = arith.constant 2 : index
    %c0_20 = arith.constant 0 : index
    %c0_21 = arith.constant 0 : index
    %39 = vector.load %arg2[%c2, %c0_20, %c0_21] : memref<11x24x1xf32, #tpu.memory_space<vmem>>, vector<1x24x1xf32>
    %40 = vector.shape_cast %39 : vector<1x24x1xf32> to vector<24x1xf32>
    %41 = vector.shape_cast %40 : vector<24x1xf32> to vector<1x24x1xf32>
    %42 = vector.broadcast %41 : vector<1x24x1xf32> to vector<2x24x32xf32>
    %43 = arith.mulf %38, %42 : vector<2x24x32xf32>
    %c2_22 = arith.constant 2 : index
    %c0_23 = arith.constant 0 : index
    %c0_24 = arith.constant 0 : index
    %44 = vector.load %arg3[%c2_22, %c0_23, %c0_24] : memref<9x1x32xf32, #tpu.memory_space<vmem>>, vector<1x1x32xf32>
    %45 = vector.shape_cast %44 : vector<1x1x32xf32> to vector<1x32xf32>
    %46 = vector.shape_cast %45 : vector<1x32xf32> to vector<1x1x32xf32>
    %47 = vector.broadcast %46 : vector<1x1x32xf32> to vector<2x24x32xf32>
    %48 = arith.mulf %43, %47 : vector<2x24x32xf32>
    %49 = arith.addf %37, %48 : vector<2x24x32xf32>
    %50 = vector.extract_strided_slice %8 {offsets = [0, 7, 0], sizes = [2, 24, 32], strides = [1, 1, 1]} : vector<2x40x32xf32> to vector<2x24x32xf32>
    %c3 = arith.constant 3 : index
    %c0_25 = arith.constant 0 : index
    %c0_26 = arith.constant 0 : index
    %51 = vector.load %arg2[%c3, %c0_25, %c0_26] : memref<11x24x1xf32, #tpu.memory_space<vmem>>, vector<1x24x1xf32>
    %52 = vector.shape_cast %51 : vector<1x24x1xf32> to vector<24x1xf32>
    %53 = vector.shape_cast %52 : vector<24x1xf32> to vector<1x24x1xf32>
    %54 = vector.broadcast %53 : vector<1x24x1xf32> to vector<2x24x32xf32>
    %55 = arith.mulf %50, %54 : vector<2x24x32xf32>
    %c3_27 = arith.constant 3 : index
    %c0_28 = arith.constant 0 : index
    %c0_29 = arith.constant 0 : index
    %56 = vector.load %arg3[%c3_27, %c0_28, %c0_29] : memref<9x1x32xf32, #tpu.memory_space<vmem>>, vector<1x1x32xf32>
    %57 = vector.shape_cast %56 : vector<1x1x32xf32> to vector<1x32xf32>
    %58 = vector.shape_cast %57 : vector<1x32xf32> to vector<1x1x32xf32>
    %59 = vector.broadcast %58 : vector<1x1x32xf32> to vector<2x24x32xf32>
    %60 = arith.mulf %55, %59 : vector<2x24x32xf32>
    %61 = arith.addf %49, %60 : vector<2x24x32xf32>
    %62 = vector.extract_strided_slice %8 {offsets = [0, 9, 0], sizes = [2, 24, 32], strides = [1, 1, 1]} : vector<2x40x32xf32> to vector<2x24x32xf32>
    %c5 = arith.constant 5 : index
    %c0_30 = arith.constant 0 : index
    %c0_31 = arith.constant 0 : index
    %63 = vector.load %arg2[%c5, %c0_30, %c0_31] : memref<11x24x1xf32, #tpu.memory_space<vmem>>, vector<1x24x1xf32>
    %64 = vector.shape_cast %63 : vector<1x24x1xf32> to vector<24x1xf32>
    %65 = vector.shape_cast %64 : vector<24x1xf32> to vector<1x24x1xf32>
    %66 = vector.broadcast %65 : vector<1x24x1xf32> to vector<2x24x32xf32>
    %67 = arith.mulf %62, %66 : vector<2x24x32xf32>
    %c5_32 = arith.constant 5 : index
    %c0_33 = arith.constant 0 : index
    %c0_34 = arith.constant 0 : index
    %68 = vector.load %arg3[%c5_32, %c0_33, %c0_34] : memref<9x1x32xf32, #tpu.memory_space<vmem>>, vector<1x1x32xf32>
    %69 = vector.shape_cast %68 : vector<1x1x32xf32> to vector<1x32xf32>
    %70 = vector.shape_cast %69 : vector<1x32xf32> to vector<1x1x32xf32>
    %71 = vector.broadcast %70 : vector<1x1x32xf32> to vector<2x24x32xf32>
    %72 = arith.mulf %67, %71 : vector<2x24x32xf32>
    %73 = arith.addf %61, %72 : vector<2x24x32xf32>
    %74 = vector.extract_strided_slice %8 {offsets = [0, 11, 0], sizes = [2, 24, 32], strides = [1, 1, 1]} : vector<2x40x32xf32> to vector<2x24x32xf32>
    %c6 = arith.constant 6 : index
    %c0_35 = arith.constant 0 : index
    %c0_36 = arith.constant 0 : index
    %75 = vector.load %arg2[%c6, %c0_35, %c0_36] : memref<11x24x1xf32, #tpu.memory_space<vmem>>, vector<1x24x1xf32>
    %76 = vector.shape_cast %75 : vector<1x24x1xf32> to vector<24x1xf32>
    %77 = vector.shape_cast %76 : vector<24x1xf32> to vector<1x24x1xf32>
    %78 = vector.broadcast %77 : vector<1x24x1xf32> to vector<2x24x32xf32>
    %79 = arith.mulf %74, %78 : vector<2x24x32xf32>
    %c6_37 = arith.constant 6 : index
    %c0_38 = arith.constant 0 : index
    %c0_39 = arith.constant 0 : index
    %80 = vector.load %arg3[%c6_37, %c0_38, %c0_39] : memref<9x1x32xf32, #tpu.memory_space<vmem>>, vector<1x1x32xf32>
    %81 = vector.shape_cast %80 : vector<1x1x32xf32> to vector<1x32xf32>
    %82 = vector.shape_cast %81 : vector<1x32xf32> to vector<1x1x32xf32>
    %83 = vector.broadcast %82 : vector<1x1x32xf32> to vector<2x24x32xf32>
    %84 = arith.mulf %79, %83 : vector<2x24x32xf32>
    %85 = arith.addf %73, %84 : vector<2x24x32xf32>
    %86 = vector.extract_strided_slice %8 {offsets = [0, 12, 0], sizes = [2, 24, 32], strides = [1, 1, 1]} : vector<2x40x32xf32> to vector<2x24x32xf32>
    %c7 = arith.constant 7 : index
    %c0_40 = arith.constant 0 : index
    %c0_41 = arith.constant 0 : index
    %87 = vector.load %arg2[%c7, %c0_40, %c0_41] : memref<11x24x1xf32, #tpu.memory_space<vmem>>, vector<1x24x1xf32>
    %88 = vector.shape_cast %87 : vector<1x24x1xf32> to vector<24x1xf32>
    %89 = vector.shape_cast %88 : vector<24x1xf32> to vector<1x24x1xf32>
    %90 = vector.broadcast %89 : vector<1x24x1xf32> to vector<2x24x32xf32>
    %91 = arith.mulf %86, %90 : vector<2x24x32xf32>
    %c7_42 = arith.constant 7 : index
    %c0_43 = arith.constant 0 : index
    %c0_44 = arith.constant 0 : index
    %92 = vector.load %arg3[%c7_42, %c0_43, %c0_44] : memref<9x1x32xf32, #tpu.memory_space<vmem>>, vector<1x1x32xf32>
    %93 = vector.shape_cast %92 : vector<1x1x32xf32> to vector<1x32xf32>
    %94 = vector.shape_cast %93 : vector<1x32xf32> to vector<1x1x32xf32>
    %95 = vector.broadcast %94 : vector<1x1x32xf32> to vector<2x24x32xf32>
    %96 = arith.mulf %91, %95 : vector<2x24x32xf32>
    %97 = arith.addf %85, %96 : vector<2x24x32xf32>
    %98 = vector.extract_strided_slice %8 {offsets = [0, 13, 0], sizes = [2, 24, 32], strides = [1, 1, 1]} : vector<2x40x32xf32> to vector<2x24x32xf32>
    %c8 = arith.constant 8 : index
    %c0_45 = arith.constant 0 : index
    %c0_46 = arith.constant 0 : index
    %99 = vector.load %arg2[%c8, %c0_45, %c0_46] : memref<11x24x1xf32, #tpu.memory_space<vmem>>, vector<1x24x1xf32>
    %100 = vector.shape_cast %99 : vector<1x24x1xf32> to vector<24x1xf32>
    %101 = vector.shape_cast %100 : vector<24x1xf32> to vector<1x24x1xf32>
    %102 = vector.broadcast %101 : vector<1x24x1xf32> to vector<2x24x32xf32>
    %103 = arith.mulf %98, %102 : vector<2x24x32xf32>
    %c8_47 = arith.constant 8 : index
    %c0_48 = arith.constant 0 : index
    %c0_49 = arith.constant 0 : index
    %104 = vector.load %arg3[%c8_47, %c0_48, %c0_49] : memref<9x1x32xf32, #tpu.memory_space<vmem>>, vector<1x1x32xf32>
    %105 = vector.shape_cast %104 : vector<1x1x32xf32> to vector<1x32xf32>
    %106 = vector.shape_cast %105 : vector<1x32xf32> to vector<1x1x32xf32>
    %107 = vector.broadcast %106 : vector<1x1x32xf32> to vector<2x24x32xf32>
    %108 = arith.mulf %103, %107 : vector<2x24x32xf32>
    %109 = arith.addf %97, %108 : vector<2x24x32xf32>
    %c0_50 = arith.constant 0 : index
    %c0_51 = arith.constant 0 : index
    %110 = vector.load %arg4[%c0_50, %c0_51] : memref<1x32xf32, #tpu.memory_space<vmem>>, vector<1x32xf32>
    %111 = vector.shape_cast %110 : vector<1x32xf32> to vector<1x1x32xf32>
    %112 = vector.broadcast %111 : vector<1x1x32xf32> to vector<2x24x32xf32>
    %113 = arith.addf %109, %112 : vector<2x24x32xf32>
    %114 = vector.shape_cast %113 : vector<2x24x32xf32> to vector<48x32xf32>
    %c0_52 = arith.constant 0 : index
    %c0_53 = arith.constant 0 : index
    %115 = vector.load %arg5[%c0_52, %c0_53] : memref<32x32xf32, #tpu.memory_space<vmem>>, vector<32x32xf32>
    %cst_54 = arith.constant dense<0.000000e+00> : vector<48x32xf32>
    %116 = tpu.matmul %114, %115, %cst_54 {dimension_numbers = #tpu.dot_dimension_numbers<[1], [0], [0], [1], [0, 0, 1, 1], [], []>} : vector<48x32xf32>, vector<32x32xf32>, vector<48x32xf32> -> vector<48x32xf32>
    %117 = vector.shape_cast %116 : vector<48x32xf32> to vector<2x24x32xf32>
    %c0_55 = arith.constant 0 : index
    %c0_56 = arith.constant 0 : index
    %118 = vector.load %arg6[%c0_55, %c0_56] : memref<1x32xf32, #tpu.memory_space<vmem>>, vector<1x32xf32>
    %119 = vector.shape_cast %118 : vector<1x32xf32> to vector<1x1x32xf32>
    %120 = vector.broadcast %119 : vector<1x1x32xf32> to vector<2x24x32xf32>
    %121 = arith.addf %117, %120 : vector<2x24x32xf32>
    %122 = vector.shape_cast %3 : vector<24x1xi1> to vector<1x24x1xi1>
    %123 = vector.broadcast %122 : vector<1x24x1xi1> to vector<2x24x32xi1>
    %124 = arith.select %123, %121, %6 : vector<2x24x32xi1>, vector<2x24x32xf32>
    %125 = arith.addf %6, %124 : vector<2x24x32xf32>
    %126 = vector.shape_cast %125 : vector<2x24x32xf32> to vector<48x32xf32>
    %c0_57 = arith.constant 0 : index
    %c0_58 = arith.constant 0 : index
    %127 = vector.load %arg7[%c0_57, %c0_58] : memref<32x32xf32, #tpu.memory_space<vmem>>, vector<32x32xf32>
    %cst_59 = arith.constant dense<0.000000e+00> : vector<48x32xf32>
    %128 = tpu.matmul %126, %127, %cst_59 {dimension_numbers = #tpu.dot_dimension_numbers<[1], [0], [0], [1], [0, 0, 1, 1], [], []>} : vector<48x32xf32>, vector<32x32xf32>, vector<48x32xf32> -> vector<48x32xf32>
    %129 = vector.shape_cast %128 : vector<48x32xf32> to vector<2x24x32xf32>
    %130 = vector.shape_cast %125 : vector<2x24x32xf32> to vector<48x32xf32>
    %c0_60 = arith.constant 0 : index
    %c0_61 = arith.constant 0 : index
    %131 = vector.load %arg8[%c0_60, %c0_61] : memref<32x32xf32, #tpu.memory_space<vmem>>, vector<32x32xf32>
    %cst_62 = arith.constant dense<0.000000e+00> : vector<48x32xf32>
    %132 = tpu.matmul %130, %131, %cst_62 {dimension_numbers = #tpu.dot_dimension_numbers<[1], [0], [0], [1], [0, 0, 1, 1], [], []>} : vector<48x32xf32>, vector<32x32xf32>, vector<48x32xf32> -> vector<48x32xf32>
    %133 = vector.shape_cast %132 : vector<48x32xf32> to vector<2x24x32xf32>
    %134 = vector.shape_cast %125 : vector<2x24x32xf32> to vector<48x32xf32>
    %c0_63 = arith.constant 0 : index
    %c0_64 = arith.constant 0 : index
    %135 = vector.load %arg9[%c0_63, %c0_64] : memref<32x32xf32, #tpu.memory_space<vmem>>, vector<32x32xf32>
    %cst_65 = arith.constant dense<0.000000e+00> : vector<48x32xf32>
    %136 = tpu.matmul %134, %135, %cst_65 {dimension_numbers = #tpu.dot_dimension_numbers<[1], [0], [0], [1], [0, 0, 1, 1], [], []>} : vector<48x32xf32>, vector<32x32xf32>, vector<48x32xf32> -> vector<48x32xf32>
    %137 = vector.shape_cast %136 : vector<48x32xf32> to vector<2x24x32xf32>
    %cst_66 = arith.constant dense<0xFF800000> : vector<2x32xf32>
    %138 = vector.multi_reduction <maximumf>, %133, %cst_66 [1] : vector<2x24x32xf32> to vector<2x32xf32>
    %139 = vector.shape_cast %138 : vector<2x32xf32> to vector<2x1x32xf32>
    %140 = vector.broadcast %139 : vector<2x1x32xf32> to vector<2x24x32xf32>
    %141 = arith.subf %133, %140 : vector<2x24x32xf32>
    %142 = math.exp %141 : vector<2x24x32xf32>
    %143 = vector.shape_cast %5 : vector<24x1xf32> to vector<1x24x1xf32>
    %144 = vector.broadcast %143 : vector<1x24x1xf32> to vector<2x24x32xf32>
    %145 = arith.mulf %142, %144 : vector<2x24x32xf32>
    %cst_67 = arith.constant dense<0.000000e+00> : vector<2x32xf32>
    %146 = vector.multi_reduction <add>, %145, %cst_67 [1] : vector<2x24x32xf32> to vector<2x32xf32>
    %147 = vector.shape_cast %146 : vector<2x32xf32> to vector<2x1x32xf32>
    %148 = arith.mulf %145, %137 : vector<2x24x32xf32>
    %cst_68 = arith.constant dense<0.000000e+00> : vector<2x32xf32>
    %149 = vector.multi_reduction <add>, %148, %cst_68 [1] : vector<2x24x32xf32> to vector<2x32xf32>
    %150 = vector.shape_cast %149 : vector<2x32xf32> to vector<2x1x32xf32>
    %151 = tpu.reciprocal %147 {approx = true} : vector<2x1x32xf32> -> vector<2x1x32xf32>
    %152 = arith.mulf %150, %151 : vector<2x1x32xf32>
    %cst_69 = arith.constant 0.000000e+00 : f32
    %153 = vector.broadcast %cst_69 : f32 to vector<2x8x32xf32>
    %154 = tpu.concatenate %153, %137, %153 in 1 : vector<2x8x32xf32>, vector<2x24x32xf32>, vector<2x8x32xf32> -> vector<2x40x32xf32>
    %c4_70 = arith.constant 4 : index
    %c0_71 = arith.constant 0 : index
    %c0_72 = arith.constant 0 : index
    %155 = vector.load %arg10[%c4_70, %c0_71, %c0_72] : memref<9x1x32xf32, #tpu.memory_space<vmem>>, vector<1x1x32xf32>
    %156 = vector.shape_cast %155 : vector<1x1x32xf32> to vector<1x32xf32>
    %157 = vector.shape_cast %156 : vector<1x32xf32> to vector<1x1x32xf32>
    %158 = vector.broadcast %157 : vector<1x1x32xf32> to vector<2x24x32xf32>
    %159 = arith.mulf %137, %158 : vector<2x24x32xf32>
    %160 = vector.extract_strided_slice %154 {offsets = [0, 3, 0], sizes = [2, 24, 32], strides = [1, 1, 1]} : vector<2x40x32xf32> to vector<2x24x32xf32>
    %c0_73 = arith.constant 0 : index
    %c0_74 = arith.constant 0 : index
    %c0_75 = arith.constant 0 : index
    %161 = vector.load %arg2[%c0_73, %c0_74, %c0_75] : memref<11x24x1xf32, #tpu.memory_space<vmem>>, vector<1x24x1xf32>
    %162 = vector.shape_cast %161 : vector<1x24x1xf32> to vector<24x1xf32>
    %163 = vector.shape_cast %162 : vector<24x1xf32> to vector<1x24x1xf32>
    %164 = vector.broadcast %163 : vector<1x24x1xf32> to vector<2x24x32xf32>
    %165 = arith.mulf %160, %164 : vector<2x24x32xf32>
    %c0_76 = arith.constant 0 : index
    %c0_77 = arith.constant 0 : index
    %c0_78 = arith.constant 0 : index
    %166 = vector.load %arg10[%c0_76, %c0_77, %c0_78] : memref<9x1x32xf32, #tpu.memory_space<vmem>>, vector<1x1x32xf32>
    %167 = vector.shape_cast %166 : vector<1x1x32xf32> to vector<1x32xf32>
    %168 = vector.shape_cast %167 : vector<1x32xf32> to vector<1x1x32xf32>
    %169 = vector.broadcast %168 : vector<1x1x32xf32> to vector<2x24x32xf32>
    %170 = arith.mulf %165, %169 : vector<2x24x32xf32>
    %171 = arith.addf %159, %170 : vector<2x24x32xf32>
    %172 = vector.extract_strided_slice %154 {offsets = [0, 4, 0], sizes = [2, 24, 32], strides = [1, 1, 1]} : vector<2x40x32xf32> to vector<2x24x32xf32>
    %c1_79 = arith.constant 1 : index
    %c0_80 = arith.constant 0 : index
    %c0_81 = arith.constant 0 : index
    %173 = vector.load %arg2[%c1_79, %c0_80, %c0_81] : memref<11x24x1xf32, #tpu.memory_space<vmem>>, vector<1x24x1xf32>
    %174 = vector.shape_cast %173 : vector<1x24x1xf32> to vector<24x1xf32>
    %175 = vector.shape_cast %174 : vector<24x1xf32> to vector<1x24x1xf32>
    %176 = vector.broadcast %175 : vector<1x24x1xf32> to vector<2x24x32xf32>
    %177 = arith.mulf %172, %176 : vector<2x24x32xf32>
    %c1_82 = arith.constant 1 : index
    %c0_83 = arith.constant 0 : index
    %c0_84 = arith.constant 0 : index
    %178 = vector.load %arg10[%c1_82, %c0_83, %c0_84] : memref<9x1x32xf32, #tpu.memory_space<vmem>>, vector<1x1x32xf32>
    %179 = vector.shape_cast %178 : vector<1x1x32xf32> to vector<1x32xf32>
    %180 = vector.shape_cast %179 : vector<1x32xf32> to vector<1x1x32xf32>
    %181 = vector.broadcast %180 : vector<1x1x32xf32> to vector<2x24x32xf32>
    %182 = arith.mulf %177, %181 : vector<2x24x32xf32>
    %183 = arith.addf %171, %182 : vector<2x24x32xf32>
    %184 = vector.extract_strided_slice %154 {offsets = [0, 5, 0], sizes = [2, 24, 32], strides = [1, 1, 1]} : vector<2x40x32xf32> to vector<2x24x32xf32>
    %c2_85 = arith.constant 2 : index
    %c0_86 = arith.constant 0 : index
    %c0_87 = arith.constant 0 : index
    %185 = vector.load %arg2[%c2_85, %c0_86, %c0_87] : memref<11x24x1xf32, #tpu.memory_space<vmem>>, vector<1x24x1xf32>
    %186 = vector.shape_cast %185 : vector<1x24x1xf32> to vector<24x1xf32>
    %187 = vector.shape_cast %186 : vector<24x1xf32> to vector<1x24x1xf32>
    %188 = vector.broadcast %187 : vector<1x24x1xf32> to vector<2x24x32xf32>
    %189 = arith.mulf %184, %188 : vector<2x24x32xf32>
    %c2_88 = arith.constant 2 : index
    %c0_89 = arith.constant 0 : index
    %c0_90 = arith.constant 0 : index
    %190 = vector.load %arg10[%c2_88, %c0_89, %c0_90] : memref<9x1x32xf32, #tpu.memory_space<vmem>>, vector<1x1x32xf32>
    %191 = vector.shape_cast %190 : vector<1x1x32xf32> to vector<1x32xf32>
    %192 = vector.shape_cast %191 : vector<1x32xf32> to vector<1x1x32xf32>
    %193 = vector.broadcast %192 : vector<1x1x32xf32> to vector<2x24x32xf32>
    %194 = arith.mulf %189, %193 : vector<2x24x32xf32>
    %195 = arith.addf %183, %194 : vector<2x24x32xf32>
    %196 = vector.extract_strided_slice %154 {offsets = [0, 7, 0], sizes = [2, 24, 32], strides = [1, 1, 1]} : vector<2x40x32xf32> to vector<2x24x32xf32>
    %c3_91 = arith.constant 3 : index
    %c0_92 = arith.constant 0 : index
    %c0_93 = arith.constant 0 : index
    %197 = vector.load %arg2[%c3_91, %c0_92, %c0_93] : memref<11x24x1xf32, #tpu.memory_space<vmem>>, vector<1x24x1xf32>
    %198 = vector.shape_cast %197 : vector<1x24x1xf32> to vector<24x1xf32>
    %199 = vector.shape_cast %198 : vector<24x1xf32> to vector<1x24x1xf32>
    %200 = vector.broadcast %199 : vector<1x24x1xf32> to vector<2x24x32xf32>
    %201 = arith.mulf %196, %200 : vector<2x24x32xf32>
    %c3_94 = arith.constant 3 : index
    %c0_95 = arith.constant 0 : index
    %c0_96 = arith.constant 0 : index
    %202 = vector.load %arg10[%c3_94, %c0_95, %c0_96] : memref<9x1x32xf32, #tpu.memory_space<vmem>>, vector<1x1x32xf32>
    %203 = vector.shape_cast %202 : vector<1x1x32xf32> to vector<1x32xf32>
    %204 = vector.shape_cast %203 : vector<1x32xf32> to vector<1x1x32xf32>
    %205 = vector.broadcast %204 : vector<1x1x32xf32> to vector<2x24x32xf32>
    %206 = arith.mulf %201, %205 : vector<2x24x32xf32>
    %207 = arith.addf %195, %206 : vector<2x24x32xf32>
    %208 = vector.extract_strided_slice %154 {offsets = [0, 9, 0], sizes = [2, 24, 32], strides = [1, 1, 1]} : vector<2x40x32xf32> to vector<2x24x32xf32>
    %c5_97 = arith.constant 5 : index
    %c0_98 = arith.constant 0 : index
    %c0_99 = arith.constant 0 : index
    %209 = vector.load %arg2[%c5_97, %c0_98, %c0_99] : memref<11x24x1xf32, #tpu.memory_space<vmem>>, vector<1x24x1xf32>
    %210 = vector.shape_cast %209 : vector<1x24x1xf32> to vector<24x1xf32>
    %211 = vector.shape_cast %210 : vector<24x1xf32> to vector<1x24x1xf32>
    %212 = vector.broadcast %211 : vector<1x24x1xf32> to vector<2x24x32xf32>
    %213 = arith.mulf %208, %212 : vector<2x24x32xf32>
    %c5_100 = arith.constant 5 : index
    %c0_101 = arith.constant 0 : index
    %c0_102 = arith.constant 0 : index
    %214 = vector.load %arg10[%c5_100, %c0_101, %c0_102] : memref<9x1x32xf32, #tpu.memory_space<vmem>>, vector<1x1x32xf32>
    %215 = vector.shape_cast %214 : vector<1x1x32xf32> to vector<1x32xf32>
    %216 = vector.shape_cast %215 : vector<1x32xf32> to vector<1x1x32xf32>
    %217 = vector.broadcast %216 : vector<1x1x32xf32> to vector<2x24x32xf32>
    %218 = arith.mulf %213, %217 : vector<2x24x32xf32>
    %219 = arith.addf %207, %218 : vector<2x24x32xf32>
    %220 = vector.extract_strided_slice %154 {offsets = [0, 11, 0], sizes = [2, 24, 32], strides = [1, 1, 1]} : vector<2x40x32xf32> to vector<2x24x32xf32>
    %c6_103 = arith.constant 6 : index
    %c0_104 = arith.constant 0 : index
    %c0_105 = arith.constant 0 : index
    %221 = vector.load %arg2[%c6_103, %c0_104, %c0_105] : memref<11x24x1xf32, #tpu.memory_space<vmem>>, vector<1x24x1xf32>
    %222 = vector.shape_cast %221 : vector<1x24x1xf32> to vector<24x1xf32>
    %223 = vector.shape_cast %222 : vector<24x1xf32> to vector<1x24x1xf32>
    %224 = vector.broadcast %223 : vector<1x24x1xf32> to vector<2x24x32xf32>
    %225 = arith.mulf %220, %224 : vector<2x24x32xf32>
    %c6_106 = arith.constant 6 : index
    %c0_107 = arith.constant 0 : index
    %c0_108 = arith.constant 0 : index
    %226 = vector.load %arg10[%c6_106, %c0_107, %c0_108] : memref<9x1x32xf32, #tpu.memory_space<vmem>>, vector<1x1x32xf32>
    %227 = vector.shape_cast %226 : vector<1x1x32xf32> to vector<1x32xf32>
    %228 = vector.shape_cast %227 : vector<1x32xf32> to vector<1x1x32xf32>
    %229 = vector.broadcast %228 : vector<1x1x32xf32> to vector<2x24x32xf32>
    %230 = arith.mulf %225, %229 : vector<2x24x32xf32>
    %231 = arith.addf %219, %230 : vector<2x24x32xf32>
    %232 = vector.extract_strided_slice %154 {offsets = [0, 12, 0], sizes = [2, 24, 32], strides = [1, 1, 1]} : vector<2x40x32xf32> to vector<2x24x32xf32>
    %c7_109 = arith.constant 7 : index
    %c0_110 = arith.constant 0 : index
    %c0_111 = arith.constant 0 : index
    %233 = vector.load %arg2[%c7_109, %c0_110, %c0_111] : memref<11x24x1xf32, #tpu.memory_space<vmem>>, vector<1x24x1xf32>
    %234 = vector.shape_cast %233 : vector<1x24x1xf32> to vector<24x1xf32>
    %235 = vector.shape_cast %234 : vector<24x1xf32> to vector<1x24x1xf32>
    %236 = vector.broadcast %235 : vector<1x24x1xf32> to vector<2x24x32xf32>
    %237 = arith.mulf %232, %236 : vector<2x24x32xf32>
    %c7_112 = arith.constant 7 : index
    %c0_113 = arith.constant 0 : index
    %c0_114 = arith.constant 0 : index
    %238 = vector.load %arg10[%c7_112, %c0_113, %c0_114] : memref<9x1x32xf32, #tpu.memory_space<vmem>>, vector<1x1x32xf32>
    %239 = vector.shape_cast %238 : vector<1x1x32xf32> to vector<1x32xf32>
    %240 = vector.shape_cast %239 : vector<1x32xf32> to vector<1x1x32xf32>
    %241 = vector.broadcast %240 : vector<1x1x32xf32> to vector<2x24x32xf32>
    %242 = arith.mulf %237, %241 : vector<2x24x32xf32>
    %243 = arith.addf %231, %242 : vector<2x24x32xf32>
    %244 = vector.extract_strided_slice %154 {offsets = [0, 13, 0], sizes = [2, 24, 32], strides = [1, 1, 1]} : vector<2x40x32xf32> to vector<2x24x32xf32>
    %c8_115 = arith.constant 8 : index
    %c0_116 = arith.constant 0 : index
    %c0_117 = arith.constant 0 : index
    %245 = vector.load %arg2[%c8_115, %c0_116, %c0_117] : memref<11x24x1xf32, #tpu.memory_space<vmem>>, vector<1x24x1xf32>
    %246 = vector.shape_cast %245 : vector<1x24x1xf32> to vector<24x1xf32>
    %247 = vector.shape_cast %246 : vector<24x1xf32> to vector<1x24x1xf32>
    %248 = vector.broadcast %247 : vector<1x24x1xf32> to vector<2x24x32xf32>
    %249 = arith.mulf %244, %248 : vector<2x24x32xf32>
    %c8_118 = arith.constant 8 : index
    %c0_119 = arith.constant 0 : index
    %c0_120 = arith.constant 0 : index
    %250 = vector.load %arg10[%c8_118, %c0_119, %c0_120] : memref<9x1x32xf32, #tpu.memory_space<vmem>>, vector<1x1x32xf32>
    %251 = vector.shape_cast %250 : vector<1x1x32xf32> to vector<1x32xf32>
    %252 = vector.shape_cast %251 : vector<1x32xf32> to vector<1x1x32xf32>
    %253 = vector.broadcast %252 : vector<1x1x32xf32> to vector<2x24x32xf32>
    %254 = arith.mulf %249, %253 : vector<2x24x32xf32>
    %255 = arith.addf %243, %254 : vector<2x24x32xf32>
    %c0_121 = arith.constant 0 : index
    %c0_122 = arith.constant 0 : index
    %256 = vector.load %arg11[%c0_121, %c0_122] : memref<1x32xf32, #tpu.memory_space<vmem>>, vector<1x32xf32>
    %257 = vector.shape_cast %256 : vector<1x32xf32> to vector<1x1x32xf32>
    %258 = vector.broadcast %257 : vector<1x1x32xf32> to vector<2x24x32xf32>
    %259 = arith.addf %255, %258 : vector<2x24x32xf32>
    %260 = vector.shape_cast %259 : vector<2x24x32xf32> to vector<48x32xf32>
    %c0_123 = arith.constant 0 : index
    %c0_124 = arith.constant 0 : index
    %261 = vector.load %arg12[%c0_123, %c0_124] : memref<32x32xf32, #tpu.memory_space<vmem>>, vector<32x32xf32>
    %cst_125 = arith.constant dense<0.000000e+00> : vector<48x32xf32>
    %262 = tpu.matmul %260, %261, %cst_125 {dimension_numbers = #tpu.dot_dimension_numbers<[1], [0], [0], [1], [0, 0, 1, 1], [], []>} : vector<48x32xf32>, vector<32x32xf32>, vector<48x32xf32> -> vector<48x32xf32>
    %263 = vector.shape_cast %262 : vector<48x32xf32> to vector<2x24x32xf32>
    %c0_126 = arith.constant 0 : index
    %c0_127 = arith.constant 0 : index
    %264 = vector.load %arg13[%c0_126, %c0_127] : memref<1x32xf32, #tpu.memory_space<vmem>>, vector<1x32xf32>
    %265 = vector.shape_cast %264 : vector<1x32xf32> to vector<1x1x32xf32>
    %266 = vector.broadcast %265 : vector<1x1x32xf32> to vector<2x24x32xf32>
    %267 = arith.addf %263, %266 : vector<2x24x32xf32>
    %268 = vector.shape_cast %3 : vector<24x1xi1> to vector<1x24x1xi1>
    %269 = vector.broadcast %268 : vector<1x24x1xi1> to vector<2x24x32xi1>
    %270 = arith.select %269, %267, %137 : vector<2x24x32xi1>, vector<2x24x32xf32>
    %271 = vector.broadcast %152 : vector<2x1x32xf32> to vector<2x24x32xf32>
    %272 = arith.addf %270, %271 : vector<2x24x32xf32>
    %273 = arith.mulf %129, %272 : vector<2x24x32xf32>
    %274 = vector.shape_cast %273 : vector<2x24x32xf32> to vector<48x32xf32>
    %c0_128 = arith.constant 0 : index
    %c0_129 = arith.constant 0 : index
    %275 = vector.load %arg14[%c0_128, %c0_129] : memref<32x32xf32, #tpu.memory_space<vmem>>, vector<32x32xf32>
    %cst_130 = arith.constant dense<0.000000e+00> : vector<48x32xf32>
    %276 = tpu.matmul %274, %275, %cst_130 {dimension_numbers = #tpu.dot_dimension_numbers<[1], [0], [0], [1], [0, 0, 1, 1], [], []>} : vector<48x32xf32>, vector<32x32xf32>, vector<48x32xf32> -> vector<48x32xf32>
    %277 = vector.shape_cast %276 : vector<48x32xf32> to vector<2x24x32xf32>
    %c0_131 = arith.constant 0 : index
    %c0_132 = arith.constant 0 : index
    %278 = vector.load %arg15[%c0_131, %c0_132] : memref<1x32xf32, #tpu.memory_space<vmem>>, vector<1x32xf32>
    %279 = vector.shape_cast %278 : vector<1x32xf32> to vector<1x1x32xf32>
    %280 = vector.broadcast %279 : vector<1x1x32xf32> to vector<2x24x32xf32>
    %281 = arith.addf %277, %280 : vector<2x24x32xf32>
    %c0_133 = arith.constant 0 : index
    %c0_134 = arith.constant 0 : index
    %c0_135 = arith.constant 0 : index
    %282 = vector.load %arg16[%c0_133, %c0_134, %c0_135] : memref<2x24x32xf32, #tpu.memory_space<vmem>>, vector<2x24x32xf32>
    tpu.vector_store %arg16[%c0_133, %c0_134, %c0_135], %281 {strides = array<i32>} : memref<2x24x32xf32, #tpu.memory_space<vmem>>, vector<2x24x32xf32>,
    return
  }
  func.func @transform_0(%arg0: i32) -> (i32, i32, i32) {
    %c0_i32 = arith.constant 0 : i32
    %c0_i32_0 = arith.constant 0 : i32
    %c0_i32_1 = arith.constant 0 : i32
    return %arg0, %c0_i32, %c0_i32_0 : i32, i32, i32
  }
  func.func @transform_1(%arg0: i32) -> (i32, i32, i32) {
    %c0_i32 = arith.constant 0 : i32
    %c0_i32_0 = arith.constant 0 : i32
    %c0_i32_1 = arith.constant 0 : i32
    %c0_i32_2 = arith.constant 0 : i32
    return %c0_i32, %c0_i32_0, %c0_i32_1 : i32, i32, i32
  }
  func.func @transform_2(%arg0: i32) -> (i32, i32, i32) {
    %c0_i32 = arith.constant 0 : i32
    %c0_i32_0 = arith.constant 0 : i32
    %c0_i32_1 = arith.constant 0 : i32
    %c0_i32_2 = arith.constant 0 : i32
    return %c0_i32, %c0_i32_0, %c0_i32_1 : i32, i32, i32
  }
  func.func @transform_3(%arg0: i32) -> (i32, i32) {
    %c0_i32 = arith.constant 0 : i32
    %c0_i32_0 = arith.constant 0 : i32
    %c0_i32_1 = arith.constant 0 : i32
    return %c0_i32, %c0_i32_0 : i32, i32
  }
  func.func @transform_4(%arg0: i32) -> (i32, i32) {
    %c0_i32 = arith.constant 0 : i32
    %c0_i32_0 = arith.constant 0 : i32
    %c0_i32_1 = arith.constant 0 : i32
    return %c0_i32, %c0_i32_0 : i32, i32
  }
  func.func @transform_5(%arg0: i32) -> (i32, i32) {
    %c0_i32 = arith.constant 0 : i32
    %c0_i32_0 = arith.constant 0 : i32
    %c0_i32_1 = arith.constant 0 : i32
    return %c0_i32, %c0_i32_0 : i32, i32
  }
  func.func @transform_6(%arg0: i32) -> (i32, i32) {
    %c0_i32 = arith.constant 0 : i32
    %c0_i32_0 = arith.constant 0 : i32
    %c0_i32_1 = arith.constant 0 : i32
    return %c0_i32, %c0_i32_0 : i32, i32
  }
  func.func @transform_7(%arg0: i32) -> (i32, i32) {
    %c0_i32 = arith.constant 0 : i32
    %c0_i32_0 = arith.constant 0 : i32
    %c0_i32_1 = arith.constant 0 : i32
    return %c0_i32, %c0_i32_0 : i32, i32
  }
  func.func @transform_8(%arg0: i32) -> (i32, i32) {
    %c0_i32 = arith.constant 0 : i32
    %c0_i32_0 = arith.constant 0 : i32
    %c0_i32_1 = arith.constant 0 : i32
    return %c0_i32, %c0_i32_0 : i32, i32
  }
  func.func @transform_9(%arg0: i32) -> (i32, i32, i32) {
    %c0_i32 = arith.constant 0 : i32
    %c0_i32_0 = arith.constant 0 : i32
    %c0_i32_1 = arith.constant 0 : i32
    %c0_i32_2 = arith.constant 0 : i32
    return %c0_i32, %c0_i32_0, %c0_i32_1 : i32, i32, i32
  }
  func.func @transform_10(%arg0: i32) -> (i32, i32) {
    %c0_i32 = arith.constant 0 : i32
    %c0_i32_0 = arith.constant 0 : i32
    %c0_i32_1 = arith.constant 0 : i32
    return %c0_i32, %c0_i32_0 : i32, i32
  }
  func.func @transform_11(%arg0: i32) -> (i32, i32) {
    %c0_i32 = arith.constant 0 : i32
    %c0_i32_0 = arith.constant 0 : i32
    %c0_i32_1 = arith.constant 0 : i32
    return %c0_i32, %c0_i32_0 : i32, i32
  }
  func.func @transform_12(%arg0: i32) -> (i32, i32) {
    %c0_i32 = arith.constant 0 : i32
    %c0_i32_0 = arith.constant 0 : i32
    %c0_i32_1 = arith.constant 0 : i32
    return %c0_i32, %c0_i32_0 : i32, i32
  }
  func.func @transform_13(%arg0: i32) -> (i32, i32) {
    %c0_i32 = arith.constant 0 : i32
    %c0_i32_0 = arith.constant 0 : i32
    %c0_i32_1 = arith.constant 0 : i32
    return %c0_i32, %c0_i32_0 : i32, i32
  }
  func.func @transform_14(%arg0: i32) -> (i32, i32) {
    %c0_i32 = arith.constant 0 : i32
    %c0_i32_0 = arith.constant 0 : i32
    %c0_i32_1 = arith.constant 0 : i32
    return %c0_i32, %c0_i32_0 : i32, i32
  }
  func.func @transform_15(%arg0: i32) -> (i32, i32, i32) {
    %c0_i32 = arith.constant 0 : i32
    %c0_i32_0 = arith.constant 0 : i32
    %c0_i32_1 = arith.constant 0 : i32
    return %arg0, %c0_i32, %c0_i32_0 : i32, i32, i32
  }
}

</mosaic_0001>

<llo_original>
// kernel: tpu_custom_call.1
$region0: #{tpu_custom_call.1}
  #allocation0 [shape = 'u32[]', space=smem, size = 0x4, offset = 0x4, fixed_abs, tag = 'smem constant byte address 0x4 - core index']
  #allocation1 [shape = 'u32[144,128]{1,0:T(1,128)}', space=vmem, size = 0x12000, scoped, tag = 'internal scratch']
  %s0 = inlined_call_operand.vmem [shape: f32[4,24,32], index: 0, kind: input, shape index: {}]
  %s1 = inlined_call_operand.vmem [shape: f32[11,24,1], index: 1, kind: input, shape index: {}]
  %s2 = inlined_call_operand.hbm [shape: f32[9,1,32], index: 2, kind: input, shape index: {}]
  %s3 = inlined_call_operand.hbm [shape: f32[1,32], index: 3, kind: input, shape index: {}]
  %s4 = inlined_call_operand.vmem [shape: f32[32,32], index: 4, kind: input, shape index: {}]
  %s5 = inlined_call_operand.hbm [shape: f32[1,32], index: 5, kind: input, shape index: {}]
  %s6 = inlined_call_operand.vmem [shape: f32[32,32], index: 6, kind: input, shape index: {}]
  %s7 = inlined_call_operand.vmem [shape: f32[32,32], index: 7, kind: input, shape index: {}]
  %s8 = inlined_call_operand.vmem [shape: f32[32,32], index: 8, kind: input, shape index: {}]
  %s9 = inlined_call_operand.vmem [shape: f32[9,1,32], index: 9, kind: input, shape index: {}]
  %s10 = inlined_call_operand.vmem [shape: f32[1,32], index: 10, kind: input, shape index: {}]
  %s11 = inlined_call_operand.vmem [shape: f32[32,32], index: 11, kind: input, shape index: {}]
  %s12 = inlined_call_operand.vmem [shape: f32[1,32], index: 12, kind: input, shape index: {}]
  %s13 = inlined_call_operand.vmem [shape: f32[32,32], index: 13, kind: input, shape index: {}]
  %s14 = inlined_call_operand.vmem [shape: f32[1,32], index: 14, kind: input, shape index: {}]
  %s15 = inlined_call_operand.hbm [shape: f32[4,24,32], index: 15, kind: output, shape index: {}]
  %s16 = sld [smem:[#allocation0]]
  $region105: #{tpu_custom_call.1} parent=0
    _
  %s18 = ssub.s32 1, %s16
  %s19 = scalar_select 0, %s18, %s16
  $region1: #{tpu_custom_call.1} parent=0
    #allocation2 [shape = 'u8[4608]{0}', space=vmem, size = 0x1400, scoped, tag = 'input window, operand 2, single buffered']
    #allocation3 [shape = 's32[2]{0}', space=sflag, size = 0x8, scoped, tag = 'scoped memory for tpu_custom_call.1']
    #allocation4 [shape = 's32[2]{0}', space=sflag, size = 0x8, scoped, tag = 'scoped memory for tpu_custom_call.1']
    #allocation5 [shape = 'u8[512]{0}', space=vmem, size = 0x400, scoped, tag = 'input window, operand 3, single buffered']
    #allocation6 [shape = 's32[1]{0}', space=sflag, size = 0x4, scoped, tag = 'scoped memory for tpu_custom_call.1']
    #allocation7 [shape = 'u8[512]{0}', space=vmem, size = 0x400, scoped, tag = 'input window, operand 5, single buffered']
    #allocation8 [shape = 'u8[49152]{0}', space=vmem, size = 0xc000, scoped, tag = 'output window, operand 0']
    %20 = vsyncpa [#allocation3], 0
    %21 = vsyncpa [#allocation6], 0
    %22 = vsyncpa [#allocation4], 0
    %s23 = scalar_lea.sflag [#allocation4], 1
    %24 = vsyncpa %s23, 0
    loop: start=0, step=1, limit=4
    $region2: #{tpu_custom_call.1} parent=1 // loop_pre_header
      _
    $region3: #{tpu_custom_call.1} parent=1 // loop_header
      %s26 = sphi 0, %s30
      %p27 = scmp.ge.s32.totalorder %s26, 4
      %s36 = sphi 0, %s38
      %s39 = sphi 0, %s36
      %s40 = sphi 0, %s39
      %s56 = sphi 0, %s40
      %s60 = sphi 0, %s60
      %s62 = sphi 0, %s60
      %s63 = sphi 0, %s62
      %s77 = sphi 0, %s63
      %s81 = sphi 0, %s81
      %s83 = sphi 0, %s81
      %s84 = sphi 0, %s83
      %s98 = sphi 0, %s84
      %s102 = sphi 0, %s102
      %s104 = sphi 0, %s102
      %s105 = sphi 0, %s104
      %s119 = sphi 0, %s105
      %s123 = sphi 0, %s123
      %s125 = sphi 0, %s123
      %s126 = sphi 0, %s125
      %s140 = sphi 0, %s126
      %s144 = sphi 0, %s144
      %s146 = sphi 0, %s144
      %s147 = sphi 0, %s146
      %s161 = sphi 0, %s147
      %s165 = sphi 0, %s165
      %s167 = sphi 0, %s165
      %s168 = sphi 0, %s167
      %s182 = sphi 0, %s168
      %s186 = sphi 0, %s186
      %s188 = sphi 0, %s186
      %s189 = sphi 0, %s188
      %s203 = sphi 0, %s189
      %s207 = sphi 0, %s207
      %s209 = sphi 0, %s207
      %s210 = sphi 0, %s209
      %s224 = sphi 0, %s210
      %s228 = sphi 0, %s228
      %s230 = sphi 0, %s228
      %s231 = sphi 0, %s230
      %s245 = sphi 0, %s231
      %s249 = sphi 0, %s249
      %s251 = sphi 0, %s249
      %s252 = sphi 0, %s251
      %s266 = sphi 0, %s252
      %s270 = sphi 0, %s270
      %s272 = sphi 0, %s270
      %s273 = sphi 0, %s272
      %s287 = sphi 0, %s273
      %s291 = sphi 0, %s291
      %s293 = sphi 0, %s291
      %s294 = sphi 0, %s293
      %s308 = sphi 0, %s294
      %s312 = sphi 0, %s312
      %s314 = sphi 0, %s312
      %s315 = sphi 0, %s314
      %s329 = sphi 0, %s315
      %s333 = sphi 0, %s333
      %s335 = sphi 0, %s333
      %s336 = sphi 0, %s335
      %s350 = sphi 0, %s336
      %s356 = sphi 0, %s358
      %s359 = sphi 0, %s356
      %s360 = sphi 0, %s359
      %s376 = sphi 0, %s360
    $region4: #{tpu_custom_call.1} parent=1 // loop_header_branch
      %29 = sbr.rel (%p27) target = $region8
    $region5: #{tpu_custom_call.1} parent=1 // loop_body
      %s31 = ssub.s32 %s26, 1
      %s32 = ssub.s32 %s26, 2
      %s33 = sadd.s32 %s26, 1
      %s34 = ssub.s32 %s26, %s33
      %p35 = scmp.eq.s32.totalorder %s34, 0
      %s37 = sadd.s32 %s36, 1
      %s38 = scalar_select %p35, %s36, %s37
      %p41 = pneg %p35
      %p42 = scmp.eq.s32.totalorder %s26, 1
      %p43 = por %p41, %p42
      %p44 = scmp.ne.s32.totalorder %s36, %s39
      %p45 = scmp.eq.s32.totalorder %s26, 0
      %p46 = por %p44, %p45
      %p47 = scmp.ne.s32.totalorder %s36, %s39
      %p48 = scmp.eq.s32.totalorder %s31, 1
      %p49 = por %p47, %p48
      %p50 = scmp.ne.s32.totalorder %s39, %s40
      %p51 = scmp.eq.s32.totalorder %s31, 0
      %p52 = por %p50, %p51
      %p53 = scmp.ne.s32.totalorder %s39, %s40
      %p54 = scmp.eq.s32.totalorder %s32, 1
      %p55 = por %p53, %p54
      %p57 = scmp.ne.s32.totalorder %s40, %s56
      %p58 = scmp.eq.s32.totalorder %s32, 0
      %p59 = por %p57, %p58
      %s61 = sadd.s32 %s60, 1
      %p64 = scmp.eq.s32.totalorder %s26, 1
      %p65 = scmp.ne.s32.totalorder %s60, %s62
      %p66 = scmp.eq.s32.totalorder %s26, 0
      %p67 = por %p65, %p66
      %p68 = scmp.ne.s32.totalorder %s60, %s62
      %p69 = scmp.eq.s32.totalorder %s31, 1
      %p70 = por %p68, %p69
      %p71 = scmp.ne.s32.totalorder %s62, %s63
      %p72 = scmp.eq.s32.totalorder %s31, 0
      %p73 = por %p71, %p72
      %p74 = scmp.ne.s32.totalorder %s62, %s63
      %p75 = scmp.eq.s32.totalorder %s32, 1
      %p76 = por %p74, %p75
      %p78 = scmp.ne.s32.totalorder %s63, %s77
      %p79 = scmp.eq.s32.totalorder %s32, 0
      %p80 = por %p78, %p79
      %s82 = sadd.s32 %s81, 1
      %p85 = scmp.eq.s32.totalorder %s26, 1
      %p86 = scmp.ne.s32.totalorder %s81, %s83
      %p87 = scmp.eq.s32.totalorder %s26, 0
      %p88 = por %p86, %p87
      %p89 = scmp.ne.s32.totalorder %s81, %s83
      %p90 = scmp.eq.s32.totalorder %s31, 1
      %p91 = por %p89, %p90
      %p92 = scmp.ne.s32.totalorder %s83, %s84
      %p93 = scmp.eq.s32.totalorder %s31, 0
      %p94 = por %p92, %p93
      %p95 = scmp.ne.s32.totalorder %s83, %s84
      %p96 = scmp.eq.s32.totalorder %s32, 1
      %p97 = por %p95, %p96
      %p99 = scmp.ne.s32.totalorder %s84, %s98
      %p100 = scmp.eq.s32.totalorder %s32, 0
      %p101 = por %p99, %p100
      %s103 = sadd.s32 %s102, 1
      %p106 = scmp.eq.s32.totalorder %s26, 1
      %p107 = scmp.ne.s32.totalorder %s102, %s104
      %p108 = scmp.eq.s32.totalorder %s26, 0
      %p109 = por %p107, %p108
      %p110 = scmp.ne.s32.totalorder %s102, %s104
      %p111 = scmp.eq.s32.totalorder %s31, 1
      %p112 = por %p110, %p111
      %p113 = scmp.ne.s32.totalorder %s104, %s105
      %p114 = scmp.eq.s32.totalorder %s31, 0
      %p115 = por %p113, %p114
      %p116 = scmp.ne.s32.totalorder %s104, %s105
      %p117 = scmp.eq.s32.totalorder %s32, 1
      %p118 = por %p116, %p117
      %p120 = scmp.ne.s32.totalorder %s105, %s119
      %p121 = scmp.eq.s32.totalorder %s32, 0
      %p122 = por %p120, %p121
      %s124 = sadd.s32 %s123, 1
      %p127 = scmp.eq.s32.totalorder %s26, 1
      %p128 = scmp.ne.s32.totalorder %s123, %s125
      %p129 = scmp.eq.s32.totalorder %s26, 0
      %p130 = por %p128, %p129
      %p131 = scmp.ne.s32.totalorder %s123, %s125
      %p132 = scmp.eq.s32.totalorder %s31, 1
      %p133 = por %p131, %p132
      %p134 = scmp.ne.s32.totalorder %s125, %s126
      %p135 = scmp.eq.s32.totalorder %s31, 0
      %p136 = por %p134, %p135
      %p137 = scmp.ne.s32.totalorder %s125, %s126
      %p138 = scmp.eq.s32.totalorder %s32, 1
      %p139 = por %p137, %p138
      %p141 = scmp.ne.s32.totalorder %s126, %s140
      %p142 = scmp.eq.s32.totalorder %s32, 0
      %p143 = por %p141, %p142
      %s145 = sadd.s32 %s144, 1
      %p148 = scmp.eq.s32.totalorder %s26, 1
      %p149 = scmp.ne.s32.totalorder %s144, %s146
      %p150 = scmp.eq.s32.totalorder %s26, 0
      %p151 = por %p149, %p150
      %p152 = scmp.ne.s32.totalorder %s144, %s146
      %p153 = scmp.eq.s32.totalorder %s31, 1
      %p154 = por %p152, %p153
      %p155 = scmp.ne.s32.totalorder %s146, %s147
      %p156 = scmp.eq.s32.totalorder %s31, 0
      %p157 = por %p155, %p156
      %p158 = scmp.ne.s32.totalorder %s146, %s147
      %p159 = scmp.eq.s32.totalorder %s32, 1
      %p160 = por %p158, %p159
      %p162 = scmp.ne.s32.totalorder %s147, %s161
      %p163 = scmp.eq.s32.totalorder %s32, 0
      %p164 = por %p162, %p163
      %s166 = sadd.s32 %s165, 1
      %p169 = scmp.eq.s32.totalorder %s26, 1
      %p170 = scmp.ne.s32.totalorder %s165, %s167
      %p171 = scmp.eq.s32.totalorder %s26, 0
      %p172 = por %p170, %p171
      %p173 = scmp.ne.s32.totalorder %s165, %s167
      %p174 = scmp.eq.s32.totalorder %s31, 1
      %p175 = por %p173, %p174
      %p176 = scmp.ne.s32.totalorder %s167, %s168
      %p177 = scmp.eq.s32.totalorder %s31, 0
      %p178 = por %p176, %p177
      %p179 = scmp.ne.s32.totalorder %s167, %s168
      %p180 = scmp.eq.s32.totalorder %s32, 1
      %p181 = por %p179, %p180
      %p183 = scmp.ne.s32.totalorder %s168, %s182
      %p184 = scmp.eq.s32.totalorder %s32, 0
      %p185 = por %p183, %p184
      %s187 = sadd.s32 %s186, 1
      %p190 = scmp.eq.s32.totalorder %s26, 1
      %p191 = scmp.ne.s32.totalorder %s186, %s188
      %p192 = scmp.eq.s32.totalorder %s26, 0
      %p193 = por %p191, %p192
      %p194 = scmp.ne.s32.totalorder %s186, %s188
      %p195 = scmp.eq.s32.totalorder %s31, 1
      %p196 = por %p194, %p195
      %p197 = scmp.ne.s32.totalorder %s188, %s189
      %p198 = scmp.eq.s32.totalorder %s31, 0
      %p199 = por %p197, %p198
      %p200 = scmp.ne.s32.totalorder %s188, %s189
      %p201 = scmp.eq.s32.totalorder %s32, 1
      %p202 = por %p200, %p201
      %p204 = scmp.ne.s32.totalorder %s189, %s203
      %p205 = scmp.eq.s32.totalorder %s32, 0
      %p206 = por %p204, %p205
      %s208 = sadd.s32 %s207, 1
      %p211 = scmp.eq.s32.totalorder %s26, 1
      %p212 = scmp.ne.s32.totalorder %s207, %s209
      %p213 = scmp.eq.s32.totalorder %s26, 0
      %p214 = por %p212, %p213
      %p215 = scmp.ne.s32.totalorder %s207, %s209
      %p216 = scmp.eq.s32.totalorder %s31, 1
      %p217 = por %p215, %p216
      %p218 = scmp.ne.s32.totalorder %s209, %s210
      %p219 = scmp.eq.s32.totalorder %s31, 0
      %p220 = por %p218, %p219
      %p221 = scmp.ne.s32.totalorder %s209, %s210
      %p222 = scmp.eq.s32.totalorder %s32, 1
      %p223 = por %p221, %p222
      %p225 = scmp.ne.s32.totalorder %s210, %s224
      %p226 = scmp.eq.s32.totalorder %s32, 0
      %p227 = por %p225, %p226
      %s229 = sadd.s32 %s228, 1
      %p232 = scmp.eq.s32.totalorder %s26, 1
      %p233 = scmp.ne.s32.totalorder %s228, %s230
      %p234 = scmp.eq.s32.totalorder %s26, 0
      %p235 = por %p233, %p234
      %p236 = scmp.ne.s32.totalorder %s228, %s230
      %p237 = scmp.eq.s32.totalorder %s31, 1
      %p238 = por %p236, %p237
      %p239 = scmp.ne.s32.totalorder %s230, %s231
      %p240 = scmp.eq.s32.totalorder %s31, 0
      %p241 = por %p239, %p240
      %p242 = scmp.ne.s32.totalorder %s230, %s231
      %p243 = scmp.eq.s32.totalorder %s32, 1
      %p244 = por %p242, %p243
      %p246 = scmp.ne.s32.totalorder %s231, %s245
      %p247 = scmp.eq.s32.totalorder %s32, 0
      %p248 = por %p246, %p247
      %s250 = sadd.s32 %s249, 1
      %p253 = scmp.eq.s32.totalorder %s26, 1
      %p254 = scmp.ne.s32.totalorder %s249, %s251
      %p255 = scmp.eq.s32.totalorder %s26, 0
      %p256 = por %p254, %p255
      %p257 = scmp.ne.s32.totalorder %s249, %s251
      %p258 = scmp.eq.s32.totalorder %s31, 1
      %p259 = por %p257, %p258
      %p260 = scmp.ne.s32.totalorder %s251, %s252
      %p261 = scmp.eq.s32.totalorder %s31, 0
      %p262 = por %p260, %p261
      %p263 = scmp.ne.s32.totalorder %s251, %s252
      %p264 = scmp.eq.s32.totalorder %s32, 1
      %p265 = por %p263, %p264
      %p267 = scmp.ne.s32.totalorder %s252, %s266
      %p268 = scmp.eq.s32.totalorder %s32, 0
      %p269 = por %p267, %p268
      %s271 = sadd.s32 %s270, 1
      %p274 = scmp.eq.s32.totalorder %s26, 1
      %p275 = scmp.ne.s32.totalorder %s270, %s272
      %p276 = scmp.eq.s32.totalorder %s26, 0
      %p277 = por %p275, %p276
      %p278 = scmp.ne.s32.totalorder %s270, %s272
      %p279 = scmp.eq.s32.totalorder %s31, 1
      %p280 = por %p278, %p279
      %p281 = scmp.ne.s32.totalorder %s272, %s273
      %p282 = scmp.eq.s32.totalorder %s31, 0
      %p283 = por %p281, %p282
      %p284 = scmp.ne.s32.totalorder %s272, %s273
      %p285 = scmp.eq.s32.totalorder %s32, 1
      %p286 = por %p284, %p285
      %p288 = scmp.ne.s32.totalorder %s273, %s287
      %p289 = scmp.eq.s32.totalorder %s32, 0
      %p290 = por %p288, %p289
      %s292 = sadd.s32 %s291, 1
      %p295 = scmp.eq.s32.totalorder %s26, 1
      %p296 = scmp.ne.s32.totalorder %s291, %s293
      %p297 = scmp.eq.s32.totalorder %s26, 0
      %p298 = por %p296, %p297
      %p299 = scmp.ne.s32.totalorder %s291, %s293
      %p300 = scmp.eq.s32.totalorder %s31, 1
      %p301 = por %p299, %p300
      %p302 = scmp.ne.s32.totalorder %s293, %s294
      %p303 = scmp.eq.s32.totalorder %s31, 0
      %p304 = por %p302, %p303
      %p305 = scmp.ne.s32.totalorder %s293, %s294
      %p306 = scmp.eq.s32.totalorder %s32, 1
      %p307 = por %p305, %p306
      %p309 = scmp.ne.s32.totalorder %s294, %s308
      %p310 = scmp.eq.s32.totalorder %s32, 0
      %p311 = por %p309, %p310
      %s313 = sadd.s32 %s312, 1
      %p316 = scmp.eq.s32.totalorder %s26, 1
      %p317 = scmp.ne.s32.totalorder %s312, %s314
      %p318 = scmp.eq.s32.totalorder %s26, 0
      %p319 = por %p317, %p318
      %p320 = scmp.ne.s32.totalorder %s312, %s314
      %p321 = scmp.eq.s32.totalorder %s31, 1
      %p322 = por %p320, %p321
      %p323 = scmp.ne.s32.totalorder %s314, %s315
      %p324 = scmp.eq.s32.totalorder %s31, 0
      %p325 = por %p323, %p324
      %p326 = scmp.ne.s32.totalorder %s314, %s315
      %p327 = scmp.eq.s32.totalorder %s32, 1
      %p328 = por %p326, %p327
      %p330 = scmp.ne.s32.totalorder %s315, %s329
      %p331 = scmp.eq.s32.totalorder %s32, 0
      %p332 = por %p330, %p331
      %s334 = sadd.s32 %s333, 1
      %p337 = scmp.eq.s32.totalorder %s26, 1
      %p338 = scmp.ne.s32.totalorder %s333, %s335
      %p339 = scmp.eq.s32.totalorder %s26, 0
      %p340 = por %p338, %p339
      %p341 = scmp.ne.s32.totalorder %s333, %s335
      %p342 = scmp.eq.s32.totalorder %s31, 1
      %p343 = por %p341, %p342
      %p344 = scmp.ne.s32.totalorder %s335, %s336
      %p345 = scmp.eq.s32.totalorder %s31, 0
      %p346 = por %p344, %p345
      %p347 = scmp.ne.s32.totalorder %s335, %s336
      %p348 = scmp.eq.s32.totalorder %s32, 1
      %p349 = por %p347, %p348
      %p351 = scmp.ne.s32.totalorder %s336, %s350
      %p352 = scmp.eq.s32.totalorder %s32, 0
      %p353 = por %p351, %p352
      %s354 = ssub.s32 %s26, %s33
      %p355 = scmp.eq.s32.totalorder %s354, 0
      %s357 = sadd.s32 %s356, 1
      %s358 = scalar_select %p355, %s356, %s357
      %p361 = pneg %p355
      %p362 = scmp.eq.s32.totalorder %s26, 1
      %p363 = por %p361, %p362
      %p364 = scmp.ne.s32.totalorder %s356, %s359
      %p365 = scmp.eq.s32.totalorder %s26, 0
      %p366 = por %p364, %p365
      %p367 = scmp.ne.s32.totalorder %s356, %s359
      %p368 = scmp.eq.s32.totalorder %s31, 1
      %p369 = por %p367, %p368
      %p370 = scmp.ne.s32.totalorder %s359, %s360
      %p371 = scmp.eq.s32.totalorder %s31, 0
      %p372 = por %p370, %p371
      %p373 = scmp.ne.s32.totalorder %s359, %s360
      %p374 = scmp.eq.s32.totalorder %s32, 1
      %p375 = por %p373, %p374
      %p377 = scmp.ne.s32.totalorder %s360, %s376
      %p378 = scmp.eq.s32.totalorder %s32, 0
      %p379 = por %p377, %p378
      %p380 = scmp.le.s32.totalorder 1, %s26
      %p381 = scmp.lt.s32.totalorder %s26, 3
      %p382 = pnand %p380, %p381
      %p383 = pneg %p382
      // Predicated region
      $region9: #{tpu_custom_call.1} parent=5 // pred_check
        _
      $region10: #{tpu_custom_call.1} parent=5 // pred_check_branch
        %385 = sbr.rel (%p382) target = $region12
      $region11: #{tpu_custom_call.1} parent=5 // pred_region
        %s386 = ssub.s32 %s26, 1
        // Predicated region
        $region13: #{tpu_custom_call.1} parent=11 // pred_check
          %p387 = pneg %p73
        $region14: #{tpu_custom_call.1} parent=11 // pred_check_branch
          %389 = sbr.rel (%p387) target = $region16
        $region15: #{tpu_custom_call.1} parent=11 // pred_region
          _
        $region16: #{tpu_custom_call.1} parent=11 // pred_fallthru
          _
        // Predicated region
        $region17: #{tpu_custom_call.1} parent=11 // pred_check
          %p390 = pneg %p94
        $region18: #{tpu_custom_call.1} parent=11 // pred_check_branch
          %392 = sbr.rel (%p390) target = $region20
        $region19: #{tpu_custom_call.1} parent=11 // pred_region
          %s394 = ssub.s32 144, 144
          %395 = vsyncadd [#allocation3], %s394
          %s396 = sshll.u32 [#allocation2], 4
          %s397 = int_to_ptr.vmem [resolvable:$true] %s396
          %402 = dma.hbm_to_vmem [thread:$0]  %s2, 144, %s397, [#allocation3], 16, 16, 1
        $region20: #{tpu_custom_call.1} parent=11 // pred_fallthru
          _
        // Predicated region
        $region21: #{tpu_custom_call.1} parent=11 // pred_check
          %p403 = pneg %p115
        $region22: #{tpu_custom_call.1} parent=11 // pred_check_branch
          %405 = sbr.rel (%p403) target = $region24
        $region23: #{tpu_custom_call.1} parent=11 // pred_region
          %s407 = ssub.s32 16, 16
          %408 = vsyncadd [#allocation6], %s407
          %s410 = sshll.u32 [#allocation5], 4
          %s411 = int_to_ptr.vmem [resolvable:$true] %s410
          %413 = dma.hbm_to_vmem [thread:$0]  %s3, 16, %s411, [#allocation6]
        $region24: #{tpu_custom_call.1} parent=11 // pred_fallthru
          _
        // Predicated region
        $region25: #{tpu_custom_call.1} parent=11 // pred_check
          %p414 = pneg %p136
        $region26: #{tpu_custom_call.1} parent=11 // pred_check_branch
          %416 = sbr.rel (%p414) target = $region28
        $region27: #{tpu_custom_call.1} parent=11 // pred_region
          _
        $region28: #{tpu_custom_call.1} parent=11 // pred_fallthru
          _
        // Predicated region
        $region29: #{tpu_custom_call.1} parent=11 // pred_check
          %p417 = pneg %p157
        $region30: #{tpu_custom_call.1} parent=11 // pred_check_branch
          %419 = sbr.rel (%p417) target = $region32
        $region31: #{tpu_custom_call.1} parent=11 // pred_region
          %s421 = ssub.s32 16, 16
          %422 = vsyncadd [#allocation6], %s421
          %s424 = sshll.u32 [#allocation7], 4
          %s425 = int_to_ptr.vmem [resolvable:$true] %s424
          %427 = dma.hbm_to_vmem [thread:$0]  %s5, 16, %s425, [#allocation6]
        $region32: #{tpu_custom_call.1} parent=11 // pred_fallthru
          _
        // Predicated region
        $region33: #{tpu_custom_call.1} parent=11 // pred_check
          %p428 = pneg %p178
        $region34: #{tpu_custom_call.1} parent=11 // pred_check_branch
          %430 = sbr.rel (%p428) target = $region36
        $region35: #{tpu_custom_call.1} parent=11 // pred_region
          _
        $region36: #{tpu_custom_call.1} parent=11 // pred_fallthru
          _
        // Predicated region
        $region37: #{tpu_custom_call.1} parent=11 // pred_check
          %p431 = pneg %p199
        $region38: #{tpu_custom_call.1} parent=11 // pred_check_branch
          %433 = sbr.rel (%p431) target = $region40
        $region39: #{tpu_custom_call.1} parent=11 // pred_region
          _
        $region40: #{tpu_custom_call.1} parent=11 // pred_fallthru
          _
        // Predicated region
        $region41: #{tpu_custom_call.1} parent=11 // pred_check
          %p434 = pneg %p220
        $region42: #{tpu_custom_call.1} parent=11 // pred_check_branch
          %436 = sbr.rel (%p434) target = $region44
        $region43: #{tpu_custom_call.1} parent=11 // pred_region
          _
        $region44: #{tpu_custom_call.1} parent=11 // pred_fallthru
          _
        // Predicated region
        $region45: #{tpu_custom_call.1} parent=11 // pred_check
          %p437 = pneg %p241
        $region46: #{tpu_custom_call.1} parent=11 // pred_check_branch
          %439 = sbr.rel (%p437) target = $region48
        $region47: #{tpu_custom_call.1} parent=11 // pred_region
          _
        $region48: #{tpu_custom_call.1} parent=11 // pred_fallthru
          _
        // Predicated region
        $region49: #{tpu_custom_call.1} parent=11 // pred_check
          %p440 = pneg %p262
        $region50: #{tpu_custom_call.1} parent=11 // pred_check_branch
          %442 = sbr.rel (%p440) target = $region52
        $region51: #{tpu_custom_call.1} parent=11 // pred_region
          _
        $region52: #{tpu_custom_call.1} parent=11 // pred_fallthru
          _
        // Predicated region
        $region53: #{tpu_custom_call.1} parent=11 // pred_check
          %p443 = pneg %p283
        $region54: #{tpu_custom_call.1} parent=11 // pred_check_branch
          %445 = sbr.rel (%p443) target = $region56
        $region55: #{tpu_custom_call.1} parent=11 // pred_region
          _
        $region56: #{tpu_custom_call.1} parent=11 // pred_fallthru
          _
        // Predicated region
        $region57: #{tpu_custom_call.1} parent=11 // pred_check
          %p446 = pneg %p304
        $region58: #{tpu_custom_call.1} parent=11 // pred_check_branch
          %448 = sbr.rel (%p446) target = $region60
        $region59: #{tpu_custom_call.1} parent=11 // pred_region
          _
        $region60: #{tpu_custom_call.1} parent=11 // pred_fallthru
          _
        // Predicated region
        $region61: #{tpu_custom_call.1} parent=11 // pred_check
          %p449 = pneg %p325
        $region62: #{tpu_custom_call.1} parent=11 // pred_check_branch
          %451 = sbr.rel (%p449) target = $region64
        $region63: #{tpu_custom_call.1} parent=11 // pred_region
          _
        $region64: #{tpu_custom_call.1} parent=11 // pred_fallthru
          _
        // Predicated region
        $region65: #{tpu_custom_call.1} parent=11 // pred_check
          %p452 = pneg %p346
        $region66: #{tpu_custom_call.1} parent=11 // pred_check_branch
          %454 = sbr.rel (%p452) target = $region68
        $region67: #{tpu_custom_call.1} parent=11 // pred_region
          _
        $region68: #{tpu_custom_call.1} parent=11 // pred_fallthru
          _
      $region12: #{tpu_custom_call.1} parent=5 // pred_fallthru
        _
      %p455 = scmp.lt.s32.totalorder %s26, 2
      // Predicated region
      $region69: #{tpu_custom_call.1} parent=5 // pred_check
        %p456 = pneg %p455
      $region70: #{tpu_custom_call.1} parent=5 // pred_check_branch
        %458 = sbr.rel (%p456) target = $region72
      $region71: #{tpu_custom_call.1} parent=5 // pred_region
        // Predicated region
        $region73: #{tpu_custom_call.1} parent=71 // pred_check
          %p459 = pneg %p46
        $region74: #{tpu_custom_call.1} parent=71 // pred_check_branch
          %461 = sbr.rel (%p459) target = $region76
        $region75: #{tpu_custom_call.1} parent=71 // pred_region
          %s462 = smul.u32 2, %s26
          %p463 = scmp.lt.s32.totalorder %s462, 3
          %s464 = scalar_select %p463, %s462, 3
          %s465 = smul.addr %s464, 3
          %s466 = smul.addr %s465, 8
          %s467 = scalar_lea.vmem %s0, %s466
          %s468 = smul.u32 2, %s26
        $region76: #{tpu_custom_call.1} parent=71 // pred_fallthru
          _
      $region72: #{tpu_custom_call.1} parent=5 // pred_fallthru
        _
      %p469 = scmp.le.s32.totalorder 1, %s26
      %p470 = scmp.lt.s32.totalorder %s26, 3
      %p471 = pnand %p469, %p470
      %p472 = pneg %p471
      // Predicated region
      $region77: #{tpu_custom_call.1} parent=5 // pred_check
        _
      $region78: #{tpu_custom_call.1} parent=5 // pred_check_branch
        %474 = sbr.rel (%p471) target = $region80
      $region79: #{tpu_custom_call.1} parent=5 // pred_region
        %s475 = ssub.s32 %s26, 1
        // Predicated region
        $region81: #{tpu_custom_call.1} parent=79 // pred_check
          %p476 = pneg %p94
        $region82: #{tpu_custom_call.1} parent=79 // pred_check_branch
          %478 = sbr.rel (%p476) target = $region84
        $region83: #{tpu_custom_call.1} parent=79 // pred_region
          %479 = dma.done [#allocation3], 144
        $region84: #{tpu_custom_call.1} parent=79 // pred_fallthru
          _
        // Predicated region
        $region85: #{tpu_custom_call.1} parent=79 // pred_check
          %p480 = pneg %p115
        $region86: #{tpu_custom_call.1} parent=79 // pred_check_branch
          %482 = sbr.rel (%p480) target = $region88
        $region87: #{tpu_custom_call.1} parent=79 // pred_region
          %483 = dma.done [#allocation6], 16
        $region88: #{tpu_custom_call.1} parent=79 // pred_fallthru
          _
        // Predicated region
        $region89: #{tpu_custom_call.1} parent=79 // pred_check
          %p484 = pneg %p157
        $region90: #{tpu_custom_call.1} parent=79 // pred_check_branch
          %486 = sbr.rel (%p484) target = $region92
        $region91: #{tpu_custom_call.1} parent=79 // pred_region
          %487 = dma.done [#allocation6], 16
        $region92: #{tpu_custom_call.1} parent=79 // pred_fallthru
          _
        %s488 = smul.u32 2, %s31
        %p489 = scmp.lt.s32.totalorder %s488, 3
        %s490 = scalar_select %p489, %s488, 3
        %s491 = smul.addr %s490, 3
        %s492 = smul.addr %s491, 8
        %s493 = scalar_lea.vmem %s0, %s492
        %p494 = pneg %p52
        %p495 = pneg %p49
        %p496 = pneg %p73
        %p497 = pneg %p70
        %p498 = pneg %p94
        %p499 = pneg %p91
        %p500 = pneg %p115
        %p501 = pneg %p112
        %p502 = pneg %p136
        %p503 = pneg %p133
        %p504 = pneg %p157
        %p505 = pneg %p154
        %p506 = pneg %p178
        %p507 = pneg %p175
        %p508 = pneg %p199
        %p509 = pneg %p196
        %p510 = pneg %p220
        %p511 = pneg %p217
        %p512 = pneg %p241
        %p513 = pneg %p238
        %p514 = pneg %p262
        %p515 = pneg %p259
        %p516 = pneg %p283
        %p517 = pneg %p280
        %p518 = pneg %p304
        %p519 = pneg %p301
        %p520 = pneg %p325
        %p521 = pneg %p322
        %p522 = pneg %p346
        %p523 = pneg %p343
        %p524 = pneg %p372
        %p525 = pneg %p369
        %s526 = sand.u32 %s359, 1
        %s527 = scalar_lea.sflag [#allocation4], %s526
        %s528 = sand.u32 %s359, 1
        %s529 = smul.addr %s528, 48
        %s530 = scalar_lea.vmem [#allocation8], %s529
        %s531 = smul.u32 2, %s31
        %p532 = scmp.lt.s32.totalorder %s531, 3
        %s533 = scalar_select %p532, %s531, 3
        %s534 = smul.addr %s533, 3
        %s535 = smul.addr %s534, 8
        %s536 = scalar_lea.vmem %s0, %s535
        %s537 = smul.u32 2, %s31
        %s538 = smul.u32 2, %s31
        %s539 = scalar_lea.vmem %s1, 240
        %v540 = vld [vmem:[%s539] sm:$0xff]
        %v541 = vld [vmem:[%s539 + $0x8] sm:$0xff]
        %v542 = vld [vmem:[%s539 + $0x10] sm:$0xff]
        %vm543 = vcmp.gt.f32.partialorder %v540, 0.5
        %vm544 = vcmp.gt.f32.partialorder %v541, 0.5
        %vm545 = vcmp.gt.f32.partialorder %v542, 0.5
        %s546 = scalar_lea.vmem %s1, 216
        %v547 = vld [vmem:[%s546] sm:$0xff]
        %v548 = vld [vmem:[%s546 + $0x8] sm:$0xff]
        %v549 = vld [vmem:[%s546 + $0x10] sm:$0xff]
        %v550 = vld [vmem:[%s536] sm:$0xff]
        %v551 = vld [vmem:[%s536 + $0x8] sm:$0xff]
        %v552 = vld [vmem:[%s536 + $0x10] sm:$0xff]
        %v553 = vld [vmem:[%s536 + $0x18] sm:$0xff]
        %v554 = vld [vmem:[%s536 + $0x20] sm:$0xff]
        %v555 = vld [vmem:[%s536 + $0x28] sm:$0xff]
        %s556 = scalar_lea.vmem [#allocation2], 4
        %v557 = vld [vmem:[%s556] sm:$0x1]
        %v559 = vlaneseq
        %v560 = vshrl.u32 %v559, 7
        %v561 = vsub.s32 0, %v560
        %v562 = vrot.slane %v557, %v561
        %v564 = vmul.f32 %v550, %v562
        %v565 = vmul.f32 %v551, %v562
        %v566 = vmul.f32 %v552, %v562
        %v567 = vmul.f32 %v553, %v562
        %v568 = vmul.f32 %v554, %v562
        %v569 = vmul.f32 %v555, %v562
        %v570 = vld [vmem:[%s1] sm:$0xff]
        %v571 = vld [vmem:[%s1 + $0x8] sm:$0xff]
        %v572 = vld [vmem:[%s1 + $0x10] sm:$0xff]
        %574 = vset.pattern.permute.xlu0 0
        %575 = vperm.xlu0 %574, %v570
        %v576 = vpop.permute.xlu0 %575
        %578 = vset.pattern.permute.xlu0 0
        %579 = vperm.xlu0 %578, %v571
        %v580 = vpop.permute.xlu0 %579
        %582 = vset.pattern.permute.xlu0 0
        %583 = vperm.xlu0 %582, %v572
        %v584 = vpop.permute.xlu0 %583
        %vm585 = vcmask 1042432
        %v586 = vrot.slane %v576, 5
        %v587 = vrot.slane %v580, 5
        %v588 = vsel %vm585, %v586, %v587
        %v589 = vrot.slane %v584, 5
        %v590 = vsel %vm585, %v587, %v589
        %v595 = vmul.f32 %v586, 0.0
        %v596 = vmul.f32 %v550, %v588
        %v597 = vmul.f32 %v551, %v590
        %v598 = vmul.f32 %v552, %v589
        %v599 = vmul.f32 %v553, %v588
        %v600 = vmul.f32 %v554, %v590
        %v601 = vmul.f32 %v555, %v589
        %v602 = vld [vmem:[#allocation2] sm:$0x1]
        %v604 = vlaneseq
        %v605 = vshrl.u32 %v604, 7
        %v606 = vsub.s32 0, %v605
        %v607 = vrot.slane %v602, %v606
        %v609 = vmul.f32 %v595, %v607
        %v610 = vmul.f32 %v596, %v607
        %v611 = vmul.f32 %v597, %v607
        %v612 = vmul.f32 %v598, %v607
        %v613 = vmul.f32 %v599, %v607
        %v614 = vmul.f32 %v600, %v607
        %v615 = vmul.f32 %v601, %v607
        %vm623 = vcmask 1044480
        %v624 = vrot.slane %v609, 3
        %v625 = vrot.slane %v610, 3
        %v626 = vsel %vm623, %v624, %v625
        %v627 = vrot.slane %v611, 3
        %v628 = vsel %vm623, %v625, %v627
        %v629 = vrot.slane %v612, 3
        %v630 = vsel %vm623, %v627, %v629
        %v631 = vrot.slane %v613, 3
        %v632 = vsel %vm623, %v624, %v631
        %v633 = vrot.slane %v614, 3
        %v634 = vsel %vm623, %v631, %v633
        %v635 = vrot.slane %v615, 3
        %v636 = vsel %vm623, %v633, %v635
        %v643 = vadd.f32 %v564, %v626
        %v644 = vadd.f32 %v565, %v628
        %v645 = vadd.f32 %v566, %v630
        %v646 = vadd.f32 %v567, %v632
        %v647 = vadd.f32 %v568, %v634
        %v648 = vadd.f32 %v569, %v636
        %s649 = scalar_lea.vmem %s1, 24
        %v650 = vld [vmem:[%s649] sm:$0xff]
        %v651 = vld [vmem:[%s649 + $0x8] sm:$0xff]
        %v652 = vld [vmem:[%s649 + $0x10] sm:$0xff]
        %654 = vset.pattern.permute.xlu0 0
        %655 = vperm.xlu0 %654, %v650
        %v656 = vpop.permute.xlu0 %655
        %658 = vset.pattern.permute.xlu0 0
        %659 = vperm.xlu0 %658, %v651
        %v660 = vpop.permute.xlu0 %659
        %662 = vset.pattern.permute.xlu0 0
        %663 = vperm.xlu0 %662, %v652
        %v664 = vpop.permute.xlu0 %663
        %vm665 = vcmask 1043456
        %v666 = vrot.slane %v656, 4
        %v667 = vrot.slane %v660, 4
        %v668 = vsel %vm665, %v666, %v667
        %v669 = vrot.slane %v664, 4
        %v670 = vsel %vm665, %v667, %v669
        %v675 = vmul.f32 %v666, 0.0
        %v676 = vmul.f32 %v550, %v668
        %v677 = vmul.f32 %v551, %v670
        %v678 = vmul.f32 %v552, %v669
        %v679 = vmul.f32 %v553, %v668
        %v680 = vmul.f32 %v554, %v670
        %v681 = vmul.f32 %v555, %v669
        %s682 = scalar_lea.vmem [#allocation2], 1
        %v683 = vld [vmem:[%s682] sm:$0x1]
        %v685 = vlaneseq
        %v686 = vshrl.u32 %v685, 7
        %v687 = vsub.s32 0, %v686
        %v688 = vrot.slane %v683, %v687
        %v690 = vmul.f32 %v675, %v688
        %v691 = vmul.f32 %v676, %v688
        %v692 = vmul.f32 %v677, %v688
        %v693 = vmul.f32 %v678, %v688
        %v694 = vmul.f32 %v679, %v688
        %v695 = vmul.f32 %v680, %v688
        %v696 = vmul.f32 %v681, %v688
        %v704 = vrot.slane %v690, 4
        %v705 = vrot.slane %v691, 4
        %v706 = vsel %vm665, %v704, %v705
        %v707 = vrot.slane %v692, 4
        %v708 = vsel %vm665, %v705, %v707
        %v709 = vrot.slane %v693, 4
        %v710 = vsel %vm665, %v707, %v709
        %v711 = vrot.slane %v694, 4
        %v712 = vsel %vm665, %v704, %v711
        %v713 = vrot.slane %v695, 4
        %v714 = vsel %vm665, %v711, %v713
        %v715 = vrot.slane %v696, 4
        %v716 = vsel %vm665, %v713, %v715
        %v723 = vadd.f32 %v643, %v706
        %v724 = vadd.f32 %v644, %v708
        %v725 = vadd.f32 %v645, %v710
        %v726 = vadd.f32 %v646, %v712
        %v727 = vadd.f32 %v647, %v714
        %v728 = vadd.f32 %v648, %v716
        %s729 = scalar_lea.vmem %s1, 48
        %v730 = vld [vmem:[%s729] sm:$0xff]
        %v731 = vld [vmem:[%s729 + $0x8] sm:$0xff]
        %v732 = vld [vmem:[%s729 + $0x10] sm:$0xff]
        %734 = vset.pattern.permute.xlu0 0
        %735 = vperm.xlu0 %734, %v730
        %v736 = vpop.permute.xlu0 %735
        %738 = vset.pattern.permute.xlu0 0
        %739 = vperm.xlu0 %738, %v731
        %v740 = vpop.permute.xlu0 %739
        %742 = vset.pattern.permute.xlu0 0
        %743 = vperm.xlu0 %742, %v732
        %v744 = vpop.permute.xlu0 %743
        %v745 = vrot.slane %v736, 3
        %v746 = vrot.slane %v740, 3
        %v747 = vsel %vm623, %v745, %v746
        %v748 = vrot.slane %v744, 3
        %v749 = vsel %vm623, %v746, %v748
        %v754 = vmul.f32 %v745, 0.0
        %v755 = vmul.f32 %v550, %v747
        %v756 = vmul.f32 %v551, %v749
        %v757 = vmul.f32 %v552, %v748
        %v758 = vmul.f32 %v553, %v747
        %v759 = vmul.f32 %v554, %v749
        %v760 = vmul.f32 %v555, %v748
        %s761 = scalar_lea.vmem [#allocation2], 2
        %v762 = vld [vmem:[%s761] sm:$0x1]
        %v764 = vlaneseq
        %v765 = vshrl.u32 %v764, 7
        %v766 = vsub.s32 0, %v765
        %v767 = vrot.slane %v762, %v766
        %v769 = vmul.f32 %v754, %v767
        %v770 = vmul.f32 %v755, %v767
        %v771 = vmul.f32 %v756, %v767
        %v772 = vmul.f32 %v757, %v767
        %v773 = vmul.f32 %v758, %v767
        %v774 = vmul.f32 %v759, %v767
        %v775 = vmul.f32 %v760, %v767
        %v783 = vrot.slane %v769, 5
        %v784 = vrot.slane %v770, 5
        %v785 = vsel %vm585, %v783, %v784
        %v786 = vrot.slane %v771, 5
        %v787 = vsel %vm585, %v784, %v786
        %v788 = vrot.slane %v772, 5
        %v789 = vsel %vm585, %v786, %v788
        %v790 = vrot.slane %v773, 5
        %v791 = vsel %vm585, %v783, %v790
        %v792 = vrot.slane %v774, 5
        %v793 = vsel %vm585, %v790, %v792
        %v794 = vrot.slane %v775, 5
        %v795 = vsel %vm585, %v792, %v794
        %v802 = vadd.f32 %v723, %v785
        %v803 = vadd.f32 %v724, %v787
        %v804 = vadd.f32 %v725, %v789
        %v805 = vadd.f32 %v726, %v791
        %v806 = vadd.f32 %v727, %v793
        %v807 = vadd.f32 %v728, %v795
        %s808 = scalar_lea.vmem %s1, 72
        %v809 = vld [vmem:[%s808] sm:$0xff]
        %v810 = vld [vmem:[%s808 + $0x8] sm:$0xff]
        %v811 = vld [vmem:[%s808 + $0x10] sm:$0xff]
        %813 = vset.pattern.permute.xlu0 0
        %814 = vperm.xlu0 %813, %v809
        %v815 = vpop.permute.xlu0 %814
        %817 = vset.pattern.permute.xlu0 0
        %818 = vperm.xlu0 %817, %v810
        %v819 = vpop.permute.xlu0 %818
        %821 = vset.pattern.permute.xlu0 0
        %822 = vperm.xlu0 %821, %v811
        %v823 = vpop.permute.xlu0 %822
        %vm824 = vcmask 1046528
        %v825 = vrot.slane %v815, 1
        %v826 = vrot.slane %v819, 1
        %v827 = vsel %vm824, %v825, %v826
        %v828 = vrot.slane %v823, 1
        %v829 = vsel %vm824, %v826, %v828
        %v834 = vmul.f32 %v825, 0.0
        %v835 = vmul.f32 %v550, %v827
        %v836 = vmul.f32 %v551, %v829
        %v837 = vmul.f32 %v552, %v828
        %v838 = vmul.f32 %v553, %v827
        %v839 = vmul.f32 %v554, %v829
        %v840 = vmul.f32 %v555, %v828
        %s841 = scalar_lea.vmem [#allocation2], 3
        %v842 = vld [vmem:[%s841] sm:$0x1]
        %v844 = vlaneseq
        %v845 = vshrl.u32 %v844, 7
        %v846 = vsub.s32 0, %v845
        %v847 = vrot.slane %v842, %v846
        %v849 = vmul.f32 %v834, %v847
        %v850 = vmul.f32 %v835, %v847
        %v851 = vmul.f32 %v836, %v847
        %v852 = vmul.f32 %v837, %v847
        %v853 = vmul.f32 %v838, %v847
        %v854 = vmul.f32 %v839, %v847
        %v855 = vmul.f32 %v840, %v847
        %vm863 = vcmask 1040384
        %v864 = vrot.slane %v849, 7
        %v865 = vrot.slane %v850, 7
        %v866 = vsel %vm863, %v864, %v865
        %v867 = vrot.slane %v851, 7
        %v868 = vsel %vm863, %v865, %v867
        %v869 = vrot.slane %v852, 7
        %v870 = vsel %vm863, %v867, %v869
        %v871 = vrot.slane %v853, 7
        %v872 = vsel %vm863, %v864, %v871
        %v873 = vrot.slane %v854, 7
        %v874 = vsel %vm863, %v871, %v873
        %v875 = vrot.slane %v855, 7
        %v876 = vsel %vm863, %v873, %v875
        %v883 = vadd.f32 %v802, %v866
        %v884 = vadd.f32 %v803, %v868
        %v885 = vadd.f32 %v804, %v870
        %v886 = vadd.f32 %v805, %v872
        %v887 = vadd.f32 %v806, %v874
        %v888 = vadd.f32 %v807, %v876
        %s889 = scalar_lea.vmem %s1, 120
        %v890 = vld [vmem:[%s889] sm:$0xff]
        %v891 = vld [vmem:[%s889 + $0x8] sm:$0xff]
        %v892 = vld [vmem:[%s889 + $0x10] sm:$0xff]
        %894 = vset.pattern.permute.xlu0 0
        %895 = vperm.xlu0 %894, %v890
        %v896 = vpop.permute.xlu0 %895
        %898 = vset.pattern.permute.xlu0 0
        %899 = vperm.xlu0 %898, %v891
        %v900 = vpop.permute.xlu0 %899
        %902 = vset.pattern.permute.xlu0 0
        %903 = vperm.xlu0 %902, %v892
        %v904 = vpop.permute.xlu0 %903
        %v905 = vrot.slane %v896, 7
        %v906 = vrot.slane %v900, 7
        %v907 = vsel %vm863, %v905, %v906
        %v908 = vrot.slane %v904, 7
        %v909 = vsel %vm863, %v906, %v908
        %v914 = vmul.f32 %v550, %v905
        %v915 = vmul.f32 %v551, %v907
        %v916 = vmul.f32 %v552, %v909
        %v917 = vmul.f32 %v908, 0.0
        %v918 = vmul.f32 %v553, %v905
        %v919 = vmul.f32 %v554, %v907
        %v920 = vmul.f32 %v555, %v909
        %s921 = scalar_lea.vmem [#allocation2], 5
        %v922 = vld [vmem:[%s921] sm:$0x1]
        %v924 = vlaneseq
        %v925 = vshrl.u32 %v924, 7
        %v926 = vsub.s32 0, %v925
        %v927 = vrot.slane %v922, %v926
        %v929 = vmul.f32 %v914, %v927
        %v930 = vmul.f32 %v915, %v927
        %v931 = vmul.f32 %v916, %v927
        %v932 = vmul.f32 %v917, %v927
        %v933 = vmul.f32 %v918, %v927
        %v934 = vmul.f32 %v919, %v927
        %v935 = vmul.f32 %v920, %v927
        %v943 = vrot.slane %v929, 1
        %v944 = vrot.slane %v930, 1
        %v945 = vsel %vm824, %v943, %v944
        %v946 = vrot.slane %v931, 1
        %v947 = vsel %vm824, %v944, %v946
        %v948 = vrot.slane %v932, 1
        %v949 = vsel %vm824, %v946, %v948
        %v950 = vrot.slane %v933, 1
        %v951 = vrot.slane %v934, 1
        %v952 = vsel %vm824, %v950, %v951
        %v953 = vrot.slane %v935, 1
        %v954 = vsel %vm824, %v951, %v953
        %v955 = vsel %vm824, %v953, %v948
        %v962 = vadd.f32 %v883, %v945
        %v963 = vadd.f32 %v884, %v947
        %v964 = vadd.f32 %v885, %v949
        %v965 = vadd.f32 %v886, %v952
        %v966 = vadd.f32 %v887, %v954
        %v967 = vadd.f32 %v888, %v955
        %s968 = scalar_lea.vmem %s1, 144
        %v969 = vld [vmem:[%s968] sm:$0xff]
        %v970 = vld [vmem:[%s968 + $0x8] sm:$0xff]
        %v971 = vld [vmem:[%s968 + $0x10] sm:$0xff]
        %973 = vset.pattern.permute.xlu0 0
        %974 = vperm.xlu0 %973, %v969
        %v975 = vpop.permute.xlu0 %974
        %977 = vset.pattern.permute.xlu0 0
        %978 = vperm.xlu0 %977, %v970
        %v979 = vpop.permute.xlu0 %978
        %981 = vset.pattern.permute.xlu0 0
        %982 = vperm.xlu0 %981, %v971
        %v983 = vpop.permute.xlu0 %982
        %v984 = vrot.slane %v975, 5
        %v985 = vrot.slane %v979, 5
        %v986 = vsel %vm585, %v984, %v985
        %v987 = vrot.slane %v983, 5
        %v988 = vsel %vm585, %v985, %v987
        %v993 = vmul.f32 %v550, %v984
        %v994 = vmul.f32 %v551, %v986
        %v995 = vmul.f32 %v552, %v988
        %v996 = vmul.f32 %v987, 0.0
        %v997 = vmul.f32 %v553, %v984
        %v998 = vmul.f32 %v554, %v986
        %v999 = vmul.f32 %v555, %v988
        %s1000 = scalar_lea.vmem [#allocation2], 6
        %v1001 = vld [vmem:[%s1000] sm:$0x1]
        %v1003 = vlaneseq
        %v1004 = vshrl.u32 %v1003, 7
        %v1005 = vsub.s32 0, %v1004
        %v1006 = vrot.slane %v1001, %v1005
        %v1008 = vmul.f32 %v993, %v1006
        %v1009 = vmul.f32 %v994, %v1006
        %v1010 = vmul.f32 %v995, %v1006
        %v1011 = vmul.f32 %v996, %v1006
        %v1012 = vmul.f32 %v997, %v1006
        %v1013 = vmul.f32 %v998, %v1006
        %v1014 = vmul.f32 %v999, %v1006
        %v1022 = vrot.slane %v1008, 3
        %v1023 = vrot.slane %v1009, 3
        %v1024 = vsel %vm623, %v1022, %v1023
        %v1025 = vrot.slane %v1010, 3
        %v1026 = vsel %vm623, %v1023, %v1025
        %v1027 = vrot.slane %v1011, 3
        %v1028 = vsel %vm623, %v1025, %v1027
        %v1029 = vrot.slane %v1012, 3
        %v1030 = vrot.slane %v1013, 3
        %v1031 = vsel %vm623, %v1029, %v1030
        %v1032 = vrot.slane %v1014, 3
        %v1033 = vsel %vm623, %v1030, %v1032
        %v1034 = vsel %vm623, %v1032, %v1027
        %v1041 = vadd.f32 %v962, %v1024
        %v1042 = vadd.f32 %v963, %v1026
        %v1043 = vadd.f32 %v964, %v1028
        %v1044 = vadd.f32 %v965, %v1031
        %v1045 = vadd.f32 %v966, %v1033
        %v1046 = vadd.f32 %v967, %v1034
        %s1047 = scalar_lea.vmem %s1, 168
        %v1048 = vld [vmem:[%s1047] sm:$0xff]
        %v1049 = vld [vmem:[%s1047 + $0x8] sm:$0xff]
        %v1050 = vld [vmem:[%s1047 + $0x10] sm:$0xff]
        %1052 = vset.pattern.permute.xlu0 0
        %1053 = vperm.xlu0 %1052, %v1048
        %v1054 = vpop.permute.xlu0 %1053
        %1056 = vset.pattern.permute.xlu0 0
        %1057 = vperm.xlu0 %1056, %v1049
        %v1058 = vpop.permute.xlu0 %1057
        %1060 = vset.pattern.permute.xlu0 0
        %1061 = vperm.xlu0 %1060, %v1050
        %v1062 = vpop.permute.xlu0 %1061
        %v1063 = vrot.slane %v1054, 4
        %v1064 = vrot.slane %v1058, 4
        %v1065 = vsel %vm665, %v1063, %v1064
        %v1066 = vrot.slane %v1062, 4
        %v1067 = vsel %vm665, %v1064, %v1066
        %v1072 = vmul.f32 %v550, %v1063
        %v1073 = vmul.f32 %v551, %v1065
        %v1074 = vmul.f32 %v552, %v1067
        %v1075 = vmul.f32 %v1066, 0.0
        %v1076 = vmul.f32 %v553, %v1063
        %v1077 = vmul.f32 %v554, %v1065
        %v1078 = vmul.f32 %v555, %v1067
        %s1079 = scalar_lea.vmem [#allocation2], 7
        %v1080 = vld [vmem:[%s1079] sm:$0x1]
        %v1082 = vlaneseq
        %v1083 = vshrl.u32 %v1082, 7
        %v1084 = vsub.s32 0, %v1083
        %v1085 = vrot.slane %v1080, %v1084
        %v1087 = vmul.f32 %v1072, %v1085
        %v1088 = vmul.f32 %v1073, %v1085
        %v1089 = vmul.f32 %v1074, %v1085
        %v1090 = vmul.f32 %v1075, %v1085
        %v1091 = vmul.f32 %v1076, %v1085
        %v1092 = vmul.f32 %v1077, %v1085
        %v1093 = vmul.f32 %v1078, %v1085
        %v1101 = vrot.slane %v1087, 4
        %v1102 = vrot.slane %v1088, 4
        %v1103 = vsel %vm665, %v1101, %v1102
        %v1104 = vrot.slane %v1089, 4
        %v1105 = vsel %vm665, %v1102, %v1104
        %v1106 = vrot.slane %v1090, 4
        %v1107 = vsel %vm665, %v1104, %v1106
        %v1108 = vrot.slane %v1091, 4
        %v1109 = vrot.slane %v1092, 4
        %v1110 = vsel %vm665, %v1108, %v1109
        %v1111 = vrot.slane %v1093, 4
        %v1112 = vsel %vm665, %v1109, %v1111
        %v1113 = vsel %vm665, %v1111, %v1106
        %v1120 = vadd.f32 %v1041, %v1103
        %v1121 = vadd.f32 %v1042, %v1105
        %v1122 = vadd.f32 %v1043, %v1107
        %v1123 = vadd.f32 %v1044, %v1110
        %v1124 = vadd.f32 %v1045, %v1112
        %v1125 = vadd.f32 %v1046, %v1113
        %s1126 = scalar_lea.vmem %s1, 192
        %v1127 = vld [vmem:[%s1126] sm:$0xff]
        %v1128 = vld [vmem:[%s1126 + $0x8] sm:$0xff]
        %v1129 = vld [vmem:[%s1126 + $0x10] sm:$0xff]
        %1131 = vset.pattern.permute.xlu0 0
        %1132 = vperm.xlu0 %1131, %v1127
        %v1133 = vpop.permute.xlu0 %1132
        %1135 = vset.pattern.permute.xlu0 0
        %1136 = vperm.xlu0 %1135, %v1128
        %v1137 = vpop.permute.xlu0 %1136
        %1139 = vset.pattern.permute.xlu0 0
        %1140 = vperm.xlu0 %1139, %v1129
        %v1141 = vpop.permute.xlu0 %1140
        %v1142 = vrot.slane %v1133, 3
        %v1143 = vrot.slane %v1137, 3
        %v1144 = vsel %vm623, %v1142, %v1143
        %v1145 = vrot.slane %v1141, 3
        %v1146 = vsel %vm623, %v1143, %v1145
        %v1151 = vmul.f32 %v550, %v1142
        %v1152 = vmul.f32 %v551, %v1144
        %v1153 = vmul.f32 %v552, %v1146
        %v1154 = vmul.f32 %v1145, 0.0
        %v1155 = vmul.f32 %v553, %v1142
        %v1156 = vmul.f32 %v554, %v1144
        %v1157 = vmul.f32 %v555, %v1146
        %s1158 = scalar_lea.vmem [#allocation2], 8
        %v1159 = vld [vmem:[%s1158] sm:$0x1]
        %v1161 = vlaneseq
        %v1162 = vshrl.u32 %v1161, 7
        %v1163 = vsub.s32 0, %v1162
        %v1164 = vrot.slane %v1159, %v1163
        %v1166 = vmul.f32 %v1151, %v1164
        %v1167 = vmul.f32 %v1152, %v1164
        %v1168 = vmul.f32 %v1153, %v1164
        %v1169 = vmul.f32 %v1154, %v1164
        %v1170 = vmul.f32 %v1155, %v1164
        %v1171 = vmul.f32 %v1156, %v1164
        %v1172 = vmul.f32 %v1157, %v1164
        %v1180 = vrot.slane %v1166, 5
        %v1181 = vrot.slane %v1167, 5
        %v1182 = vsel %vm585, %v1180, %v1181
        %v1183 = vrot.slane %v1168, 5
        %v1184 = vsel %vm585, %v1181, %v1183
        %v1185 = vrot.slane %v1169, 5
        %v1186 = vsel %vm585, %v1183, %v1185
        %v1187 = vrot.slane %v1170, 5
        %v1188 = vrot.slane %v1171, 5
        %v1189 = vsel %vm585, %v1187, %v1188
        %v1190 = vrot.slane %v1172, 5
        %v1191 = vsel %vm585, %v1188, %v1190
        %v1192 = vsel %vm585, %v1190, %v1185
        %v1199 = vadd.f32 %v1120, %v1182
        %v1200 = vadd.f32 %v1121, %v1184
        %v1201 = vadd.f32 %v1122, %v1186
        %v1202 = vadd.f32 %v1123, %v1189
        %v1203 = vadd.f32 %v1124, %v1191
        %v1204 = vadd.f32 %v1125, %v1192
        %v1205 = vld [vmem:[#allocation5] sm:$0x1]
        %v1207 = vlaneseq
        %v1208 = vshrl.u32 %v1207, 7
        %v1209 = vsub.s32 0, %v1208
        %v1210 = vrot.slane %v1205, %v1209
        %v1212 = vadd.f32 %v1199, %v1210
        %v1213 = vadd.f32 %v1200, %v1210
        %v1214 = vadd.f32 %v1201, %v1210
        %v1215 = vadd.f32 %v1202, %v1210
        %v1216 = vadd.f32 %v1203, %v1210
        %v1217 = vadd.f32 %v1204, %v1210
        %v1218 = vld [vmem:[%s4] sm:$0xff]
        %v1219 = vld [vmem:[%s4 + $0x8] sm:$0xff]
        %v1220 = vld [vmem:[%s4 + $0x10] sm:$0xff]
        %v1221 = vld [vmem:[%s4 + $0x18] sm:$0xff]
        %vm1222 = vcmask 261120
        %v1224 = vsel %vm1222, %v1212, 0
        %v1227 = vsel %vm1222, %v1213, 0
        %v1230 = vsel %vm1222, %v1214, 0
        %v1233 = vsel %vm1222, %v1215, 0
        %v1236 = vsel %vm1222, %v1216, 0
        %v1239 = vsel %vm1222, %v1217, 0
        %1241 = vmatprep.subr.mxu0 0.0
        %1242 = vmatpush1.msra.mxu0 %v1218
        %1243 = vmatprep.subr.mxu0 0.0
        %1244 = vmatpush1.msra.mxu0 %v1219
        %1245 = vmatprep.subr.mxu0 0.0
        %1246 = vmatpush1.msra.mxu0 %v1220
        %1247 = vmatprep.subr.mxu0 0.0
        %1248 = vmatpush1.msra.mxu0 %v1221
        %1249 = vmatprep.subr.mxu0 0.0
        %1250 = vmatpush1.msra.mxu0 0.0
        %1251 = vmatprep.subr.mxu0 0.0
        %1252 = vmatpush1.msra.mxu0 0.0
        %1253 = vmatprep.subr.mxu0 0.0
        %1254 = vmatpush1.msra.mxu0 0.0
        %1255 = vmatprep.subr.mxu0 0.0
        %1256 = vmatpush1.msra.mxu0 0.0
        %1257 = vmatprep.subr.mxu0 0.0
        %1258 = vmatpush1.msra.mxu0 0.0
        %1259 = vmatprep.subr.mxu0 0.0
        %1260 = vmatpush1.msra.mxu0 0.0
        %1261 = vmatprep.subr.mxu0 0.0
        %1262 = vmatpush1.msra.mxu0 0.0
        %1263 = vmatprep.subr.mxu0 0.0
        %1264 = vmatpush1.msra.mxu0 0.0
        %1265 = vmatprep.subr.mxu0 0.0
        %1266 = vmatpush1.msra.mxu0 0.0
        %1267 = vmatprep.subr.mxu0 0.0
        %1268 = vmatpush1.msra.mxu0 0.0
        %1269 = vmatprep.subr.mxu0 0.0
        %1270 = vmatpush1.msra.mxu0 0.0
        %1271 = vmatprep.subr.mxu0 0.0
        %1272 = vmatpush1.msra.mxu0 0.0
        %1273 = vmatprep.subr.mxu0 0.0
        %1274 = vmatpush1.msra.mxu0 0.0
        %1275 = vmatprep.subr.mxu0 0.0
        %1276 = vmatpush1.msra.mxu0 0.0
        %1277 = vmatprep.subr.mxu0 0.0
        %1278 = vmatpush1.msra.mxu0 0.0
        %1279 = vmatprep.subr.mxu0 0.0
        %1280 = vmatpush1.msra.mxu0 0.0
        %1281 = vmatprep.subr.mxu0 0.0
        %1282 = vmatpush1.msra.mxu0 0.0
        %1283 = vmatprep.subr.mxu0 0.0
        %1284 = vmatpush1.msra.mxu0 0.0
        %1285 = vmatprep.subr.mxu0 0.0
        %1286 = vmatpush1.msra.mxu0 0.0
        %1287 = vmatprep.subr.mxu0 0.0
        %1288 = vmatpush1.msra.mxu0 0.0
        %1289 = vmatprep.subr.mxu0 0.0
        %1290 = vmatpush1.msra.mxu0 0.0
        %1291 = vmatprep.subr.mxu0 0.0
        %1292 = vmatpush1.msra.mxu0 0.0
        %1293 = vmatprep.subr.mxu0 0.0
        %1294 = vmatpush1.msra.mxu0 0.0
        %1295 = vmatprep.subr.mxu0 0.0
        %1296 = vmatpush1.msra.mxu0 0.0
        %1297 = vmatprep.subr.mxu0 0.0
        %1298 = vmatpush1.msra.mxu0 0.0
        %1299 = vmatprep.subr.mxu0 0.0
        %1300 = vmatpush1.msra.mxu0 0.0
        %1301 = vmatprep.subr.mxu0 0.0
        %1302 = vmatpush1.msra.mxu0 0.0
        %1303 = vmatprep.subr.mxu0 0.0
        %1304 = vmatpush1.msra.mxu0 0.0
        %1305 = vmatprep.mubr.f32.mxu0 0.0
        %1306 = vmatmul.mubr.f32.gmra.mrb[0].mxu0 %v1224
        %v1307 = vpop.f32.mrb[0].mxu0
        %v1308 = vadd.f32 0.0, %v1307
        %v1309 = vpop.f32.mrb[0].mxu0
        %1310 = vmatprep.mubr.f32.mxu0 0.0
        %1311 = vmatmul.mubr.f32.gmra.mrb[0].mxu0 %v1227
        %v1312 = vpop.f32.mrb[0].mxu0
        %v1313 = vadd.f32 0.0, %v1312
        %v1314 = vpop.f32.mrb[0].mxu0
        %1315 = vmatprep.mubr.f32.mxu0 0.0
        %1316 = vmatmul.mubr.f32.gmra.mrb[0].mxu0 %v1230
        %v1317 = vpop.f32.mrb[0].mxu0
        %v1318 = vadd.f32 0.0, %v1317
        %v1319 = vpop.f32.mrb[0].mxu0
        %1320 = vmatprep.mubr.f32.mxu0 0.0
        %1321 = vmatmul.mubr.f32.gmra.mrb[0].mxu0 %v1233
        %v1322 = vpop.f32.mrb[0].mxu0
        %v1323 = vadd.f32 0.0, %v1322
        %v1324 = vpop.f32.mrb[0].mxu0
        %1325 = vmatprep.mubr.f32.mxu0 0.0
        %1326 = vmatmul.mubr.f32.gmra.mrb[0].mxu0 %v1236
        %v1327 = vpop.f32.mrb[0].mxu0
        %v1328 = vadd.f32 0.0, %v1327
        %v1329 = vpop.f32.mrb[0].mxu0
        %1330 = vmatprep.mubr.f32.mxu0 0.0
        %1331 = vmatmul.mubr.f32.gmra.mrb[0].mxu0 %v1239
        %v1332 = vpop.f32.mrb[0].mxu0
        %v1333 = vadd.f32 0.0, %v1332
        %v1334 = vpop.f32.mrb[0].mxu0
        %1335 = vdwg.mxu0
        %v1336 = vld [vmem:[#allocation7] sm:$0x1]
        %v1338 = vlaneseq
        %v1339 = vshrl.u32 %v1338, 7
        %v1340 = vsub.s32 0, %v1339
        %v1341 = vrot.slane %v1336, %v1340
        %v1343 = vadd.f32 %v1308, %v1341
        %v1344 = vadd.f32 %v1313, %v1341
        %v1345 = vadd.f32 %v1318, %v1341
        %v1346 = vadd.f32 %v1323, %v1341
        %v1347 = vadd.f32 %v1328, %v1341
        %v1348 = vadd.f32 %v1333, %v1341
        %v1349 = vsel %vm543, 1, 0
        %v1350 = vsel %vm544, 1, 0
        %v1351 = vsel %vm545, 1, 0
        %1352 = vset.pattern.permute.xlu0 0
        %1353 = vperm.xlu0 %1352, %v1349
        %v1354 = vpop.permute.xlu0 %1353
        %1355 = vset.pattern.permute.xlu0 0
        %1356 = vperm.xlu0 %1355, %v1350
        %v1357 = vpop.permute.xlu0 %1356
        %1358 = vset.pattern.permute.xlu0 0
        %1359 = vperm.xlu0 %1358, %v1351
        %v1360 = vpop.permute.xlu0 %1359
        %vm1361 = vcmp.eq.s32.totalorder %v1354, 1
        %vm1362 = vcmp.eq.s32.totalorder %v1357, 1
        %vm1363 = vcmp.eq.s32.totalorder %v1360, 1
        %v1364 = vsel %vm1361, %v1343, %v550
        %v1365 = vsel %vm1362, %v1344, %v551
        %v1366 = vsel %vm1363, %v1345, %v552
        %v1367 = vsel %vm1361, %v1346, %v553
        %v1368 = vsel %vm1362, %v1347, %v554
        %v1369 = vsel %vm1363, %v1348, %v555
        %v1370 = vadd.f32 %v550, %v1364
        %v1371 = vadd.f32 %v551, %v1365
        %v1372 = vadd.f32 %v552, %v1366
        %v1373 = vadd.f32 %v553, %v1367
        %v1374 = vadd.f32 %v554, %v1368
        %v1375 = vadd.f32 %v555, %v1369
        %v1376 = vld [vmem:[%s6] sm:$0xff]
        %v1377 = vld [vmem:[%s6 + $0x8] sm:$0xff]
        %v1378 = vld [vmem:[%s6 + $0x10] sm:$0xff]
        %v1379 = vld [vmem:[%s6 + $0x18] sm:$0xff]
        %v1381 = vsel %vm1222, %v1370, 0
        %v1384 = vsel %vm1222, %v1371, 0
        %v1387 = vsel %vm1222, %v1372, 0
        %v1390 = vsel %vm1222, %v1373, 0
        %v1393 = vsel %vm1222, %v1374, 0
        %v1396 = vsel %vm1222, %v1375, 0
        %1398 = vmatprep.subr.mxu0 0.0
        %1399 = vmatpush1.msra.mxu0 %v1376
        %1400 = vmatprep.subr.mxu0 0.0
        %1401 = vmatpush1.msra.mxu0 %v1377
        %1402 = vmatprep.subr.mxu0 0.0
        %1403 = vmatpush1.msra.mxu0 %v1378
        %1404 = vmatprep.subr.mxu0 0.0
        %1405 = vmatpush1.msra.mxu0 %v1379
        %1406 = vmatprep.subr.mxu0 0.0
        %1407 = vmatpush1.msra.mxu0 0.0
        %1408 = vmatprep.subr.mxu0 0.0
        %1409 = vmatpush1.msra.mxu0 0.0
        %1410 = vmatprep.subr.mxu0 0.0
        %1411 = vmatpush1.msra.mxu0 0.0
        %1412 = vmatprep.subr.mxu0 0.0
        %1413 = vmatpush1.msra.mxu0 0.0
        %1414 = vmatprep.subr.mxu0 0.0
        %1415 = vmatpush1.msra.mxu0 0.0
        %1416 = vmatprep.subr.mxu0 0.0
        %1417 = vmatpush1.msra.mxu0 0.0
        %1418 = vmatprep.subr.mxu0 0.0
        %1419 = vmatpush1.msra.mxu0 0.0
        %1420 = vmatprep.subr.mxu0 0.0
        %1421 = vmatpush1.msra.mxu0 0.0
        %1422 = vmatprep.subr.mxu0 0.0
        %1423 = vmatpush1.msra.mxu0 0.0
        %1424 = vmatprep.subr.mxu0 0.0
        %1425 = vmatpush1.msra.mxu0 0.0
        %1426 = vmatprep.subr.mxu0 0.0
        %1427 = vmatpush1.msra.mxu0 0.0
        %1428 = vmatprep.subr.mxu0 0.0
        %1429 = vmatpush1.msra.mxu0 0.0
        %1430 = vmatprep.subr.mxu0 0.0
        %1431 = vmatpush1.msra.mxu0 0.0
        %1432 = vmatprep.subr.mxu0 0.0
        %1433 = vmatpush1.msra.mxu0 0.0
        %1434 = vmatprep.subr.mxu0 0.0
        %1435 = vmatpush1.msra.mxu0 0.0
        %1436 = vmatprep.subr.mxu0 0.0
        %1437 = vmatpush1.msra.mxu0 0.0
        %1438 = vmatprep.subr.mxu0 0.0
        %1439 = vmatpush1.msra.mxu0 0.0
        %1440 = vmatprep.subr.mxu0 0.0
        %1441 = vmatpush1.msra.mxu0 0.0
        %1442 = vmatprep.subr.mxu0 0.0
        %1443 = vmatpush1.msra.mxu0 0.0
        %1444 = vmatprep.subr.mxu0 0.0
        %1445 = vmatpush1.msra.mxu0 0.0
        %1446 = vmatprep.subr.mxu0 0.0
        %1447 = vmatpush1.msra.mxu0 0.0
        %1448 = vmatprep.subr.mxu0 0.0
        %1449 = vmatpush1.msra.mxu0 0.0
        %1450 = vmatprep.subr.mxu0 0.0
        %1451 = vmatpush1.msra.mxu0 0.0
        %1452 = vmatprep.subr.mxu0 0.0
        %1453 = vmatpush1.msra.mxu0 0.0
        %1454 = vmatprep.subr.mxu0 0.0
        %1455 = vmatpush1.msra.mxu0 0.0
        %1456 = vmatprep.subr.mxu0 0.0
        %1457 = vmatpush1.msra.mxu0 0.0
        %1458 = vmatprep.subr.mxu0 0.0
        %1459 = vmatpush1.msra.mxu0 0.0
        %1460 = vmatprep.subr.mxu0 0.0
        %1461 = vmatpush1.msra.mxu0 0.0
        %1462 = vmatprep.mubr.f32.mxu0 0.0
        %1463 = vmatmul.mubr.f32.gmra.mrb[0].mxu0 %v1381
        %v1464 = vpop.f32.mrb[0].mxu0
        %v1465 = vadd.f32 0.0, %v1464
        %v1466 = vpop.f32.mrb[0].mxu0
        %1467 = vmatprep.mubr.f32.mxu0 0.0
        %1468 = vmatmul.mubr.f32.gmra.mrb[0].mxu0 %v1384
        %v1469 = vpop.f32.mrb[0].mxu0
        %v1470 = vadd.f32 0.0, %v1469
        %v1471 = vpop.f32.mrb[0].mxu0
        %1472 = vmatprep.mubr.f32.mxu0 0.0
        %1473 = vmatmul.mubr.f32.gmra.mrb[0].mxu0 %v1387
        %v1474 = vpop.f32.mrb[0].mxu0
        %v1475 = vadd.f32 0.0, %v1474
        %v1476 = vpop.f32.mrb[0].mxu0
        %1477 = vmatprep.mubr.f32.mxu0 0.0
        %1478 = vmatmul.mubr.f32.gmra.mrb[0].mxu0 %v1390
        %v1479 = vpop.f32.mrb[0].mxu0
        %v1480 = vadd.f32 0.0, %v1479
        %v1481 = vpop.f32.mrb[0].mxu0
        %1482 = vmatprep.mubr.f32.mxu0 0.0
        %1483 = vmatmul.mubr.f32.gmra.mrb[0].mxu0 %v1393
        %v1484 = vpop.f32.mrb[0].mxu0
        %v1485 = vadd.f32 0.0, %v1484
        %v1486 = vpop.f32.mrb[0].mxu0
        %1487 = vmatprep.mubr.f32.mxu0 0.0
        %1488 = vmatmul.mubr.f32.gmra.mrb[0].mxu0 %v1396
        %v1489 = vpop.f32.mrb[0].mxu0
        %v1490 = vadd.f32 0.0, %v1489
        %v1491 = vpop.f32.mrb[0].mxu0
        %1492 = vdwg.mxu0
        %v1493 = vld [vmem:[%s7] sm:$0xff]
        %v1494 = vld [vmem:[%s7 + $0x8] sm:$0xff]
        %v1495 = vld [vmem:[%s7 + $0x10] sm:$0xff]
        %v1496 = vld [vmem:[%s7 + $0x18] sm:$0xff]
        %1497 = vmatprep.subr.mxu0 0.0
        %1498 = vmatpush1.msra.mxu0 %v1493
        %1499 = vmatprep.subr.mxu0 0.0
        %1500 = vmatpush1.msra.mxu0 %v1494
        %1501 = vmatprep.subr.mxu0 0.0
        %1502 = vmatpush1.msra.mxu0 %v1495
        %1503 = vmatprep.subr.mxu0 0.0
        %1504 = vmatpush1.msra.mxu0 %v1496
        %1505 = vmatprep.subr.mxu0 0.0
        %1506 = vmatpush1.msra.mxu0 0.0
        %1507 = vmatprep.subr.mxu0 0.0
        %1508 = vmatpush1.msra.mxu0 0.0
        %1509 = vmatprep.subr.mxu0 0.0
        %1510 = vmatpush1.msra.mxu0 0.0
        %1511 = vmatprep.subr.mxu0 0.0
        %1512 = vmatpush1.msra.mxu0 0.0
        %1513 = vmatprep.subr.mxu0 0.0
        %1514 = vmatpush1.msra.mxu0 0.0
        %1515 = vmatprep.subr.mxu0 0.0
        %1516 = vmatpush1.msra.mxu0 0.0
        %1517 = vmatprep.subr.mxu0 0.0
        %1518 = vmatpush1.msra.mxu0 0.0
        %1519 = vmatprep.subr.mxu0 0.0
        %1520 = vmatpush1.msra.mxu0 0.0
        %1521 = vmatprep.subr.mxu0 0.0
        %1522 = vmatpush1.msra.mxu0 0.0
        %1523 = vmatprep.subr.mxu0 0.0
        %1524 = vmatpush1.msra.mxu0 0.0
        %1525 = vmatprep.subr.mxu0 0.0
        %1526 = vmatpush1.msra.mxu0 0.0
        %1527 = vmatprep.subr.mxu0 0.0
        %1528 = vmatpush1.msra.mxu0 0.0
        %1529 = vmatprep.subr.mxu0 0.0
        %1530 = vmatpush1.msra.mxu0 0.0
        %1531 = vmatprep.subr.mxu0 0.0
        %1532 = vmatpush1.msra.mxu0 0.0
        %1533 = vmatprep.subr.mxu0 0.0
        %1534 = vmatpush1.msra.mxu0 0.0
        %1535 = vmatprep.subr.mxu0 0.0
        %1536 = vmatpush1.msra.mxu0 0.0
        %1537 = vmatprep.subr.mxu0 0.0
        %1538 = vmatpush1.msra.mxu0 0.0
        %1539 = vmatprep.subr.mxu0 0.0
        %1540 = vmatpush1.msra.mxu0 0.0
        %1541 = vmatprep.subr.mxu0 0.0
        %1542 = vmatpush1.msra.mxu0 0.0
        %1543 = vmatprep.subr.mxu0 0.0
        %1544 = vmatpush1.msra.mxu0 0.0
        %1545 = vmatprep.subr.mxu0 0.0
        %1546 = vmatpush1.msra.mxu0 0.0
        %1547 = vmatprep.subr.mxu0 0.0
        %1548 = vmatpush1.msra.mxu0 0.0
        %1549 = vmatprep.subr.mxu0 0.0
        %1550 = vmatpush1.msra.mxu0 0.0
        %1551 = vmatprep.subr.mxu0 0.0
        %1552 = vmatpush1.msra.mxu0 0.0
        %1553 = vmatprep.subr.mxu0 0.0
        %1554 = vmatpush1.msra.mxu0 0.0
        %1555 = vmatprep.subr.mxu0 0.0
        %1556 = vmatpush1.msra.mxu0 0.0
        %1557 = vmatprep.subr.mxu0 0.0
        %1558 = vmatpush1.msra.mxu0 0.0
        %1559 = vmatprep.subr.mxu0 0.0
        %1560 = vmatpush1.msra.mxu0 0.0
        %1561 = vmatprep.mubr.f32.mxu0 0.0
        %1562 = vmatmul.mubr.f32.gmra.mrb[0].mxu0 %v1381
        %v1563 = vpop.f32.mrb[0].mxu0
        %v1564 = vadd.f32 0.0, %v1563
        %v1565 = vpop.f32.mrb[0].mxu0
        %1566 = vmatprep.mubr.f32.mxu0 0.0
        %1567 = vmatmul.mubr.f32.gmra.mrb[0].mxu0 %v1384
        %v1568 = vpop.f32.mrb[0].mxu0
        %v1569 = vadd.f32 0.0, %v1568
        %v1570 = vpop.f32.mrb[0].mxu0
        %1571 = vmatprep.mubr.f32.mxu0 0.0
        %1572 = vmatmul.mubr.f32.gmra.mrb[0].mxu0 %v1387
        %v1573 = vpop.f32.mrb[0].mxu0
        %v1574 = vadd.f32 0.0, %v1573
        %v1575 = vpop.f32.mrb[0].mxu0
        %1576 = vmatprep.mubr.f32.mxu0 0.0
        %1577 = vmatmul.mubr.f32.gmra.mrb[0].mxu0 %v1390
        %v1578 = vpop.f32.mrb[0].mxu0
        %v1579 = vadd.f32 0.0, %v1578
        %v1580 = vpop.f32.mrb[0].mxu0
        %1581 = vmatprep.mubr.f32.mxu0 0.0
        %1582 = vmatmul.mubr.f32.gmra.mrb[0].mxu0 %v1393
        %v1583 = vpop.f32.mrb[0].mxu0
        %v1584 = vadd.f32 0.0, %v1583
        %v1585 = vpop.f32.mrb[0].mxu0
        %1586 = vmatprep.mubr.f32.mxu0 0.0
        %1587 = vmatmul.mubr.f32.gmra.mrb[0].mxu0 %v1396
        %v1588 = vpop.f32.mrb[0].mxu0
        %v1589 = vadd.f32 0.0, %v1588
        %v1590 = vpop.f32.mrb[0].mxu0
        %1591 = vdwg.mxu0
        %v1592 = vld [vmem:[%s8] sm:$0xff]
        %v1593 = vld [vmem:[%s8 + $0x8] sm:$0xff]
        %v1594 = vld [vmem:[%s8 + $0x10] sm:$0xff]
        %v1595 = vld [vmem:[%s8 + $0x18] sm:$0xff]
        %1596 = vmatprep.subr.mxu0 0.0
        %1597 = vmatpush1.msra.mxu0 %v1592
        %1598 = vmatprep.subr.mxu0 0.0
        %1599 = vmatpush1.msra.mxu0 %v1593
        %1600 = vmatprep.subr.mxu0 0.0
        %1601 = vmatpush1.msra.mxu0 %v1594
        %1602 = vmatprep.subr.mxu0 0.0
        %1603 = vmatpush1.msra.mxu0 %v1595
        %1604 = vmatprep.subr.mxu0 0.0
        %1605 = vmatpush1.msra.mxu0 0.0
        %1606 = vmatprep.subr.mxu0 0.0
        %1607 = vmatpush1.msra.mxu0 0.0
        %1608 = vmatprep.subr.mxu0 0.0
        %1609 = vmatpush1.msra.mxu0 0.0
        %1610 = vmatprep.subr.mxu0 0.0
        %1611 = vmatpush1.msra.mxu0 0.0
        %1612 = vmatprep.subr.mxu0 0.0
        %1613 = vmatpush1.msra.mxu0 0.0
        %1614 = vmatprep.subr.mxu0 0.0
        %1615 = vmatpush1.msra.mxu0 0.0
        %1616 = vmatprep.subr.mxu0 0.0
        %1617 = vmatpush1.msra.mxu0 0.0
        %1618 = vmatprep.subr.mxu0 0.0
        %1619 = vmatpush1.msra.mxu0 0.0
        %1620 = vmatprep.subr.mxu0 0.0
        %1621 = vmatpush1.msra.mxu0 0.0
        %1622 = vmatprep.subr.mxu0 0.0
        %1623 = vmatpush1.msra.mxu0 0.0
        %1624 = vmatprep.subr.mxu0 0.0
        %1625 = vmatpush1.msra.mxu0 0.0
        %1626 = vmatprep.subr.mxu0 0.0
        %1627 = vmatpush1.msra.mxu0 0.0
        %1628 = vmatprep.subr.mxu0 0.0
        %1629 = vmatpush1.msra.mxu0 0.0
        %1630 = vmatprep.subr.mxu0 0.0
        %1631 = vmatpush1.msra.mxu0 0.0
        %1632 = vmatprep.subr.mxu0 0.0
        %1633 = vmatpush1.msra.mxu0 0.0
        %1634 = vmatprep.subr.mxu0 0.0
        %1635 = vmatpush1.msra.mxu0 0.0
        %1636 = vmatprep.subr.mxu0 0.0
        %1637 = vmatpush1.msra.mxu0 0.0
        %1638 = vmatprep.subr.mxu0 0.0
        %1639 = vmatpush1.msra.mxu0 0.0
        %1640 = vmatprep.subr.mxu0 0.0
        %1641 = vmatpush1.msra.mxu0 0.0
        %1642 = vmatprep.subr.mxu0 0.0
        %1643 = vmatpush1.msra.mxu0 0.0
        %1644 = vmatprep.subr.mxu0 0.0
        %1645 = vmatpush1.msra.mxu0 0.0
        %1646 = vmatprep.subr.mxu0 0.0
        %1647 = vmatpush1.msra.mxu0 0.0
        %1648 = vmatprep.subr.mxu0 0.0
        %1649 = vmatpush1.msra.mxu0 0.0
        %1650 = vmatprep.subr.mxu0 0.0
        %1651 = vmatpush1.msra.mxu0 0.0
        %1652 = vmatprep.subr.mxu0 0.0
        %1653 = vmatpush1.msra.mxu0 0.0
        %1654 = vmatprep.subr.mxu0 0.0
        %1655 = vmatpush1.msra.mxu0 0.0
        %1656 = vmatprep.subr.mxu0 0.0
        %1657 = vmatpush1.msra.mxu0 0.0
        %1658 = vmatprep.subr.mxu0 0.0
        %1659 = vmatpush1.msra.mxu0 0.0
        %1660 = vmatprep.mubr.f32.mxu0 0.0
        %1661 = vmatmul.mubr.f32.gmra.mrb[0].mxu0 %v1381
        %v1662 = vpop.f32.mrb[0].mxu0
        %v1663 = vadd.f32 0.0, %v1662
        %v1664 = vpop.f32.mrb[0].mxu0
        %1665 = vmatprep.mubr.f32.mxu0 0.0
        %1666 = vmatmul.mubr.f32.gmra.mrb[0].mxu0 %v1384
        %v1667 = vpop.f32.mrb[0].mxu0
        %v1668 = vadd.f32 0.0, %v1667
        %v1669 = vpop.f32.mrb[0].mxu0
        %1670 = vmatprep.mubr.f32.mxu0 0.0
        %1671 = vmatmul.mubr.f32.gmra.mrb[0].mxu0 %v1387
        %v1672 = vpop.f32.mrb[0].mxu0
        %v1673 = vadd.f32 0.0, %v1672
        %v1674 = vpop.f32.mrb[0].mxu0
        %1675 = vmatprep.mubr.f32.mxu0 0.0
        %1676 = vmatmul.mubr.f32.gmra.mrb[0].mxu0 %v1390
        %v1677 = vpop.f32.mrb[0].mxu0
        %v1678 = vadd.f32 0.0, %v1677
        %v1679 = vpop.f32.mrb[0].mxu0
        %1680 = vmatprep.mubr.f32.mxu0 0.0
        %1681 = vmatmul.mubr.f32.gmra.mrb[0].mxu0 %v1393
        %v1682 = vpop.f32.mrb[0].mxu0
        %v1683 = vadd.f32 0.0, %v1682
        %v1684 = vpop.f32.mrb[0].mxu0
        %1685 = vmatprep.mubr.f32.mxu0 0.0
        %1686 = vmatmul.mubr.f32.gmra.mrb[0].mxu0 %v1396
        %v1687 = vpop.f32.mrb[0].mxu0
        %v1688 = vadd.f32 0.0, %v1687
        %v1689 = vpop.f32.mrb[0].mxu0
        %1690 = vdwg.mxu0
        %v1691 = vsel %vm1222, %v1564, -inf
        %v1692 = vsel %vm1222, %v1569, -inf
        %v1693 = vsel %vm1222, %v1574, -inf
        %v1694 = vmax.f32 %v1691, %v1693
        %v1695 = vmax.f32 %v1694, %v1692
        %v1696 = vrot.slane %v1695, 4
        %v1697 = vmax.f32 %v1695, %v1696
        %v1698 = vrot.slane %v1697, 2
        %v1699 = vmax.f32 %v1697, %v1698
        %v1700 = vrot.slane %v1699, 1
        %v1701 = vmax.f32 %v1699, %v1700
        %v1702 = vsel %vm1222, %v1579, -inf
        %v1703 = vsel %vm1222, %v1584, -inf
        %v1704 = vsel %vm1222, %v1589, -inf
        %v1705 = vmax.f32 %v1702, %v1704
        %v1706 = vmax.f32 %v1705, %v1703
        %v1707 = vrot.slane %v1706, 4
        %v1708 = vmax.f32 %v1706, %v1707
        %v1709 = vrot.slane %v1708, 2
        %v1710 = vmax.f32 %v1708, %v1709
        %v1711 = vrot.slane %v1710, 1
        %v1712 = vmax.f32 %v1710, %v1711
        %v1713 = vsub.f32 %v1564, %v1701
        %v1714 = vsub.f32 %v1569, %v1701
        %v1715 = vsub.f32 %v1574, %v1701
        %v1716 = vsub.f32 %v1579, %v1712
        %v1717 = vsub.f32 %v1584, %v1712
        %v1718 = vsub.f32 %v1589, %v1712
        %v1719 = vmul.f32 %v1713, 1.442695
        %v1720 = vpow.pop %v1719
        %v1721 = vmul.f32 %v1714, 1.442695
        %v1722 = vpow.pop %v1721
        %v1723 = vmul.f32 %v1715, 1.442695
        %v1724 = vpow.pop %v1723
        %v1725 = vmul.f32 %v1716, 1.442695
        %v1726 = vpow.pop %v1725
        %v1727 = vmul.f32 %v1717, 1.442695
        %v1728 = vpow.pop %v1727
        %v1729 = vmul.f32 %v1718, 1.442695
        %v1730 = vpow.pop %v1729
        %1732 = vset.pattern.permute.xlu0 0
        %1733 = vperm.xlu0 %1732, %v547
        %v1734 = vpop.permute.xlu0 %1733
        %1737 = vset.pattern.permute.xlu0 0
        %1738 = vperm.xlu0 %1737, %v548
        %v1739 = vpop.permute.xlu0 %1738
        %1742 = vset.pattern.permute.xlu0 0
        %1743 = vperm.xlu0 %1742, %v549
        %v1744 = vpop.permute.xlu0 %1743
        %v1746 = vmul.f32 %v1720, %v1734
        %v1747 = vmul.f32 %v1722, %v1739
        %v1748 = vmul.f32 %v1724, %v1744
        %v1749 = vmul.f32 %v1726, %v1734
        %v1750 = vmul.f32 %v1728, %v1739
        %v1751 = vmul.f32 %v1730, %v1744
        %v1752 = vsel %vm1222, %v1746, 0.0
        %v1753 = vsel %vm1222, %v1747, 0.0
        %v1754 = vadd.f32 %v1752, %v1753
        %v1755 = vsel %vm1222, %v1748, 0.0
        %v1756 = vadd.f32 %v1754, %v1755
        %v1757 = vrot.slane %v1756, 4
        %v1758 = vadd.f32 %v1756, %v1757
        %v1759 = vrot.slane %v1758, 2
        %v1760 = vadd.f32 %v1758, %v1759
        %v1761 = vrot.slane %v1760, 1
        %v1762 = vadd.f32 %v1760, %v1761
        %v1763 = vsel %vm1222, %v1749, 0.0
        %v1764 = vsel %vm1222, %v1750, 0.0
        %v1765 = vadd.f32 %v1763, %v1764
        %v1766 = vsel %vm1222, %v1751, 0.0
        %v1767 = vadd.f32 %v1765, %v1766
        %v1768 = vrot.slane %v1767, 4
        %v1769 = vadd.f32 %v1767, %v1768
        %v1770 = vrot.slane %v1769, 2
        %v1771 = vadd.f32 %v1769, %v1770
        %v1772 = vrot.slane %v1771, 1
        %v1773 = vadd.f32 %v1771, %v1772
        %v1774 = vmul.f32 %v1746, %v1663
        %v1775 = vmul.f32 %v1747, %v1668
        %v1776 = vmul.f32 %v1748, %v1673
        %v1777 = vmul.f32 %v1749, %v1678
        %v1778 = vmul.f32 %v1750, %v1683
        %v1779 = vmul.f32 %v1751, %v1688
        %v1780 = vsel %vm1222, %v1774, 0.0
        %v1781 = vsel %vm1222, %v1775, 0.0
        %v1782 = vadd.f32 %v1780, %v1781
        %v1783 = vsel %vm1222, %v1776, 0.0
        %v1784 = vadd.f32 %v1782, %v1783
        %v1785 = vrot.slane %v1784, 4
        %v1786 = vadd.f32 %v1784, %v1785
        %v1787 = vrot.slane %v1786, 2
        %v1788 = vadd.f32 %v1786, %v1787
        %v1789 = vrot.slane %v1788, 1
        %v1790 = vadd.f32 %v1788, %v1789
        %v1791 = vsel %vm1222, %v1777, 0.0
        %v1792 = vsel %vm1222, %v1778, 0.0
        %v1793 = vadd.f32 %v1791, %v1792
        %v1794 = vsel %vm1222, %v1779, 0.0
        %v1795 = vadd.f32 %v1793, %v1794
        %v1796 = vrot.slane %v1795, 4
        %v1797 = vadd.f32 %v1795, %v1796
        %v1798 = vrot.slane %v1797, 2
        %v1799 = vadd.f32 %v1797, %v1798
        %v1800 = vrot.slane %v1799, 1
        %v1801 = vadd.f32 %v1799, %v1800
        %v1802 = vrcp.pop %v1762
        %v1803 = vrcp.pop %v1773
        %v1804 = vmul.f32 %v1790, %v1802
        %v1805 = vmul.f32 %v1801, %v1803
        %s1806 = scalar_lea.vmem %s9, 4
        %v1807 = vld [vmem:[%s1806] sm:$0x1]
        %v1809 = vlaneseq
        %v1810 = vshrl.u32 %v1809, 7
        %v1811 = vsub.s32 0, %v1810
        %v1812 = vrot.slane %v1807, %v1811
        %v1814 = vmul.f32 %v1663, %v1812
        %v1815 = vmul.f32 %v1668, %v1812
        %v1816 = vmul.f32 %v1673, %v1812
        %v1817 = vmul.f32 %v1678, %v1812
        %v1818 = vmul.f32 %v1683, %v1812
        %v1819 = vmul.f32 %v1688, %v1812
        %v1820 = vmul.f32 %v1663, %v588
        %v1821 = vmul.f32 %v1668, %v590
        %v1822 = vmul.f32 %v1673, %v589
        %v1823 = vmul.f32 %v1678, %v588
        %v1824 = vmul.f32 %v1683, %v590
        %v1825 = vmul.f32 %v1688, %v589
        %v1826 = vld [vmem:[%s9] sm:$0x1]
        %v1828 = vlaneseq
        %v1829 = vshrl.u32 %v1828, 7
        %v1830 = vsub.s32 0, %v1829
        %v1831 = vrot.slane %v1826, %v1830
        %v1833 = vmul.f32 %v595, %v1831
        %v1834 = vmul.f32 %v1820, %v1831
        %v1835 = vmul.f32 %v1821, %v1831
        %v1836 = vmul.f32 %v1822, %v1831
        %v1837 = vmul.f32 %v1823, %v1831
        %v1838 = vmul.f32 %v1824, %v1831
        %v1839 = vmul.f32 %v1825, %v1831
        %v1847 = vrot.slane %v1833, 3
        %v1848 = vrot.slane %v1834, 3
        %v1849 = vsel %vm623, %v1847, %v1848
        %v1850 = vrot.slane %v1835, 3
        %v1851 = vsel %vm623, %v1848, %v1850
        %v1852 = vrot.slane %v1836, 3
        %v1853 = vsel %vm623, %v1850, %v1852
        %v1854 = vrot.slane %v1837, 3
        %v1855 = vsel %vm623, %v1847, %v1854
        %v1856 = vrot.slane %v1838, 3
        %v1857 = vsel %vm623, %v1854, %v1856
        %v1858 = vrot.slane %v1839, 3
        %v1859 = vsel %vm623, %v1856, %v1858
        %v1866 = vadd.f32 %v1814, %v1849
        %v1867 = vadd.f32 %v1815, %v1851
        %v1868 = vadd.f32 %v1816, %v1853
        %v1869 = vadd.f32 %v1817, %v1855
        %v1870 = vadd.f32 %v1818, %v1857
        %v1871 = vadd.f32 %v1819, %v1859
        %v1872 = vmul.f32 %v1663, %v668
        %v1873 = vmul.f32 %v1668, %v670
        %v1874 = vmul.f32 %v1673, %v669
        %v1875 = vmul.f32 %v1678, %v668
        %v1876 = vmul.f32 %v1683, %v670
        %v1877 = vmul.f32 %v1688, %v669
        %s1878 = scalar_lea.vmem %s9, 1
        %v1879 = vld [vmem:[%s1878] sm:$0x1]
        %v1881 = vlaneseq
        %v1882 = vshrl.u32 %v1881, 7
        %v1883 = vsub.s32 0, %v1882
        %v1884 = vrot.slane %v1879, %v1883
        %v1886 = vmul.f32 %v675, %v1884
        %v1887 = vmul.f32 %v1872, %v1884
        %v1888 = vmul.f32 %v1873, %v1884
        %v1889 = vmul.f32 %v1874, %v1884
        %v1890 = vmul.f32 %v1875, %v1884
        %v1891 = vmul.f32 %v1876, %v1884
        %v1892 = vmul.f32 %v1877, %v1884
        %v1900 = vrot.slane %v1886, 4
        %v1901 = vrot.slane %v1887, 4
        %v1902 = vsel %vm665, %v1900, %v1901
        %v1903 = vrot.slane %v1888, 4
        %v1904 = vsel %vm665, %v1901, %v1903
        %v1905 = vrot.slane %v1889, 4
        %v1906 = vsel %vm665, %v1903, %v1905
        %v1907 = vrot.slane %v1890, 4
        %v1908 = vsel %vm665, %v1900, %v1907
        %v1909 = vrot.slane %v1891, 4
        %v1910 = vsel %vm665, %v1907, %v1909
        %v1911 = vrot.slane %v1892, 4
        %v1912 = vsel %vm665, %v1909, %v1911
        %v1919 = vadd.f32 %v1866, %v1902
        %v1920 = vadd.f32 %v1867, %v1904
        %v1921 = vadd.f32 %v1868, %v1906
        %v1922 = vadd.f32 %v1869, %v1908
        %v1923 = vadd.f32 %v1870, %v1910
        %v1924 = vadd.f32 %v1871, %v1912
        %v1925 = vmul.f32 %v1663, %v747
        %v1926 = vmul.f32 %v1668, %v749
        %v1927 = vmul.f32 %v1673, %v748
        %v1928 = vmul.f32 %v1678, %v747
        %v1929 = vmul.f32 %v1683, %v749
        %v1930 = vmul.f32 %v1688, %v748
        %s1931 = scalar_lea.vmem %s9, 2
        %v1932 = vld [vmem:[%s1931] sm:$0x1]
        %v1934 = vlaneseq
        %v1935 = vshrl.u32 %v1934, 7
        %v1936 = vsub.s32 0, %v1935
        %v1937 = vrot.slane %v1932, %v1936
        %v1939 = vmul.f32 %v754, %v1937
        %v1940 = vmul.f32 %v1925, %v1937
        %v1941 = vmul.f32 %v1926, %v1937
        %v1942 = vmul.f32 %v1927, %v1937
        %v1943 = vmul.f32 %v1928, %v1937
        %v1944 = vmul.f32 %v1929, %v1937
        %v1945 = vmul.f32 %v1930, %v1937
        %v1953 = vrot.slane %v1939, 5
        %v1954 = vrot.slane %v1940, 5
        %v1955 = vsel %vm585, %v1953, %v1954
        %v1956 = vrot.slane %v1941, 5
        %v1957 = vsel %vm585, %v1954, %v1956
        %v1958 = vrot.slane %v1942, 5
        %v1959 = vsel %vm585, %v1956, %v1958
        %v1960 = vrot.slane %v1943, 5
        %v1961 = vsel %vm585, %v1953, %v1960
        %v1962 = vrot.slane %v1944, 5
        %v1963 = vsel %vm585, %v1960, %v1962
        %v1964 = vrot.slane %v1945, 5
        %v1965 = vsel %vm585, %v1962, %v1964
        %v1972 = vadd.f32 %v1919, %v1955
        %v1973 = vadd.f32 %v1920, %v1957
        %v1974 = vadd.f32 %v1921, %v1959
        %v1975 = vadd.f32 %v1922, %v1961
        %v1976 = vadd.f32 %v1923, %v1963
        %v1977 = vadd.f32 %v1924, %v1965
        %v1978 = vmul.f32 %v1663, %v827
        %v1979 = vmul.f32 %v1668, %v829
        %v1980 = vmul.f32 %v1673, %v828
        %v1981 = vmul.f32 %v1678, %v827
        %v1982 = vmul.f32 %v1683, %v829
        %v1983 = vmul.f32 %v1688, %v828
        %s1984 = scalar_lea.vmem %s9, 3
        %v1985 = vld [vmem:[%s1984] sm:$0x1]
        %v1987 = vlaneseq
        %v1988 = vshrl.u32 %v1987, 7
        %v1989 = vsub.s32 0, %v1988
        %v1990 = vrot.slane %v1985, %v1989
        %v1992 = vmul.f32 %v834, %v1990
        %v1993 = vmul.f32 %v1978, %v1990
        %v1994 = vmul.f32 %v1979, %v1990
        %v1995 = vmul.f32 %v1980, %v1990
        %v1996 = vmul.f32 %v1981, %v1990
        %v1997 = vmul.f32 %v1982, %v1990
        %v1998 = vmul.f32 %v1983, %v1990
        %v2006 = vrot.slane %v1992, 7
        %v2007 = vrot.slane %v1993, 7
        %v2008 = vsel %vm863, %v2006, %v2007
        %v2009 = vrot.slane %v1994, 7
        %v2010 = vsel %vm863, %v2007, %v2009
        %v2011 = vrot.slane %v1995, 7
        %v2012 = vsel %vm863, %v2009, %v2011
        %v2013 = vrot.slane %v1996, 7
        %v2014 = vsel %vm863, %v2006, %v2013
        %v2015 = vrot.slane %v1997, 7
        %v2016 = vsel %vm863, %v2013, %v2015
        %v2017 = vrot.slane %v1998, 7
        %v2018 = vsel %vm863, %v2015, %v2017
        %v2025 = vadd.f32 %v1972, %v2008
        %v2026 = vadd.f32 %v1973, %v2010
        %v2027 = vadd.f32 %v1974, %v2012
        %v2028 = vadd.f32 %v1975, %v2014
        %v2029 = vadd.f32 %v1976, %v2016
        %v2030 = vadd.f32 %v1977, %v2018
        %v2031 = vmul.f32 %v1663, %v905
        %v2032 = vmul.f32 %v1668, %v907
        %v2033 = vmul.f32 %v1673, %v909
        %v2034 = vmul.f32 %v1678, %v905
        %v2035 = vmul.f32 %v1683, %v907
        %v2036 = vmul.f32 %v1688, %v909
        %s2037 = scalar_lea.vmem %s9, 5
        %v2038 = vld [vmem:[%s2037] sm:$0x1]
        %v2040 = vlaneseq
        %v2041 = vshrl.u32 %v2040, 7
        %v2042 = vsub.s32 0, %v2041
        %v2043 = vrot.slane %v2038, %v2042
        %v2045 = vmul.f32 %v2031, %v2043
        %v2046 = vmul.f32 %v2032, %v2043
        %v2047 = vmul.f32 %v2033, %v2043
        %v2048 = vmul.f32 %v917, %v2043
        %v2049 = vmul.f32 %v2034, %v2043
        %v2050 = vmul.f32 %v2035, %v2043
        %v2051 = vmul.f32 %v2036, %v2043
        %v2059 = vrot.slane %v2045, 1
        %v2060 = vrot.slane %v2046, 1
        %v2061 = vsel %vm824, %v2059, %v2060
        %v2062 = vrot.slane %v2047, 1
        %v2063 = vsel %vm824, %v2060, %v2062
        %v2064 = vrot.slane %v2048, 1
        %v2065 = vsel %vm824, %v2062, %v2064
        %v2066 = vrot.slane %v2049, 1
        %v2067 = vrot.slane %v2050, 1
        %v2068 = vsel %vm824, %v2066, %v2067
        %v2069 = vrot.slane %v2051, 1
        %v2070 = vsel %vm824, %v2067, %v2069
        %v2071 = vsel %vm824, %v2069, %v2064
        %v2078 = vadd.f32 %v2025, %v2061
        %v2079 = vadd.f32 %v2026, %v2063
        %v2080 = vadd.f32 %v2027, %v2065
        %v2081 = vadd.f32 %v2028, %v2068
        %v2082 = vadd.f32 %v2029, %v2070
        %v2083 = vadd.f32 %v2030, %v2071
        %v2084 = vmul.f32 %v1663, %v984
        %v2085 = vmul.f32 %v1668, %v986
        %v2086 = vmul.f32 %v1673, %v988
        %v2087 = vmul.f32 %v1678, %v984
        %v2088 = vmul.f32 %v1683, %v986
        %v2089 = vmul.f32 %v1688, %v988
        %s2090 = scalar_lea.vmem %s9, 6
        %v2091 = vld [vmem:[%s2090] sm:$0x1]
        %v2093 = vlaneseq
        %v2094 = vshrl.u32 %v2093, 7
        %v2095 = vsub.s32 0, %v2094
        %v2096 = vrot.slane %v2091, %v2095
        %v2098 = vmul.f32 %v2084, %v2096
        %v2099 = vmul.f32 %v2085, %v2096
        %v2100 = vmul.f32 %v2086, %v2096
        %v2101 = vmul.f32 %v996, %v2096
        %v2102 = vmul.f32 %v2087, %v2096
        %v2103 = vmul.f32 %v2088, %v2096
        %v2104 = vmul.f32 %v2089, %v2096
        %v2112 = vrot.slane %v2098, 3
        %v2113 = vrot.slane %v2099, 3
        %v2114 = vsel %vm623, %v2112, %v2113
        %v2115 = vrot.slane %v2100, 3
        %v2116 = vsel %vm623, %v2113, %v2115
        %v2117 = vrot.slane %v2101, 3
        %v2118 = vsel %vm623, %v2115, %v2117
        %v2119 = vrot.slane %v2102, 3
        %v2120 = vrot.slane %v2103, 3
        %v2121 = vsel %vm623, %v2119, %v2120
        %v2122 = vrot.slane %v2104, 3
        %v2123 = vsel %vm623, %v2120, %v2122
        %v2124 = vsel %vm623, %v2122, %v2117
        %v2131 = vadd.f32 %v2078, %v2114
        %v2132 = vadd.f32 %v2079, %v2116
        %v2133 = vadd.f32 %v2080, %v2118
        %v2134 = vadd.f32 %v2081, %v2121
        %v2135 = vadd.f32 %v2082, %v2123
        %v2136 = vadd.f32 %v2083, %v2124
        %v2137 = vmul.f32 %v1663, %v1063
        %v2138 = vmul.f32 %v1668, %v1065
        %v2139 = vmul.f32 %v1673, %v1067
        %v2140 = vmul.f32 %v1678, %v1063
        %v2141 = vmul.f32 %v1683, %v1065
        %v2142 = vmul.f32 %v1688, %v1067
        %s2143 = scalar_lea.vmem %s9, 7
        %v2144 = vld [vmem:[%s2143] sm:$0x1]
        %v2146 = vlaneseq
        %v2147 = vshrl.u32 %v2146, 7
        %v2148 = vsub.s32 0, %v2147
        %v2149 = vrot.slane %v2144, %v2148
        %v2151 = vmul.f32 %v2137, %v2149
        %v2152 = vmul.f32 %v2138, %v2149
        %v2153 = vmul.f32 %v2139, %v2149
        %v2154 = vmul.f32 %v1075, %v2149
        %v2155 = vmul.f32 %v2140, %v2149
        %v2156 = vmul.f32 %v2141, %v2149
        %v2157 = vmul.f32 %v2142, %v2149
        %v2165 = vrot.slane %v2151, 4
        %v2166 = vrot.slane %v2152, 4
        %v2167 = vsel %vm665, %v2165, %v2166
        %v2168 = vrot.slane %v2153, 4
        %v2169 = vsel %vm665, %v2166, %v2168
        %v2170 = vrot.slane %v2154, 4
        %v2171 = vsel %vm665, %v2168, %v2170
        %v2172 = vrot.slane %v2155, 4
        %v2173 = vrot.slane %v2156, 4
        %v2174 = vsel %vm665, %v2172, %v2173
        %v2175 = vrot.slane %v2157, 4
        %v2176 = vsel %vm665, %v2173, %v2175
        %v2177 = vsel %vm665, %v2175, %v2170
        %v2184 = vadd.f32 %v2131, %v2167
        %v2185 = vadd.f32 %v2132, %v2169
        %v2186 = vadd.f32 %v2133, %v2171
        %v2187 = vadd.f32 %v2134, %v2174
        %v2188 = vadd.f32 %v2135, %v2176
        %v2189 = vadd.f32 %v2136, %v2177
        %v2190 = vmul.f32 %v1663, %v1142
        %v2191 = vmul.f32 %v1668, %v1144
        %v2192 = vmul.f32 %v1673, %v1146
        %v2193 = vmul.f32 %v1678, %v1142
        %v2194 = vmul.f32 %v1683, %v1144
        %v2195 = vmul.f32 %v1688, %v1146
        %s2196 = scalar_lea.vmem %s9, 8
        %v2197 = vld [vmem:[%s2196] sm:$0x1]
        %v2199 = vlaneseq
        %v2200 = vshrl.u32 %v2199, 7
        %v2201 = vsub.s32 0, %v2200
        %v2202 = vrot.slane %v2197, %v2201
        %v2204 = vmul.f32 %v2190, %v2202
        %v2205 = vmul.f32 %v2191, %v2202
        %v2206 = vmul.f32 %v2192, %v2202
        %v2207 = vmul.f32 %v1154, %v2202
        %v2208 = vmul.f32 %v2193, %v2202
        %v2209 = vmul.f32 %v2194, %v2202
        %v2210 = vmul.f32 %v2195, %v2202
        %v2218 = vrot.slane %v2204, 5
        %v2219 = vrot.slane %v2205, 5
        %v2220 = vsel %vm585, %v2218, %v2219
        %v2221 = vrot.slane %v2206, 5
        %v2222 = vsel %vm585, %v2219, %v2221
        %v2223 = vrot.slane %v2207, 5
        %v2224 = vsel %vm585, %v2221, %v2223
        %v2225 = vrot.slane %v2208, 5
        %v2226 = vrot.slane %v2209, 5
        %v2227 = vsel %vm585, %v2225, %v2226
        %v2228 = vrot.slane %v2210, 5
        %v2229 = vsel %vm585, %v2226, %v2228
        %v2230 = vsel %vm585, %v2228, %v2223
        %v2237 = vadd.f32 %v2184, %v2220
        %v2238 = vadd.f32 %v2185, %v2222
        %v2239 = vadd.f32 %v2186, %v2224
        %v2240 = vadd.f32 %v2187, %v2227
        %v2241 = vadd.f32 %v2188, %v2229
        %v2242 = vadd.f32 %v2189, %v2230
        %v2243 = vld [vmem:[%s10] sm:$0x1]
        %v2245 = vlaneseq
        %v2246 = vshrl.u32 %v2245, 7
        %v2247 = vsub.s32 0, %v2246
        %v2248 = vrot.slane %v2243, %v2247
        %v2250 = vadd.f32 %v2237, %v2248
        %v2251 = vadd.f32 %v2238, %v2248
        %v2252 = vadd.f32 %v2239, %v2248
        %v2253 = vadd.f32 %v2240, %v2248
        %v2254 = vadd.f32 %v2241, %v2248
        %v2255 = vadd.f32 %v2242, %v2248
        %v2256 = vld [vmem:[%s11] sm:$0xff]
        %v2257 = vld [vmem:[%s11 + $0x8] sm:$0xff]
        %v2258 = vld [vmem:[%s11 + $0x10] sm:$0xff]
        %v2259 = vld [vmem:[%s11 + $0x18] sm:$0xff]
        %v2261 = vsel %vm1222, %v2250, 0
        %v2264 = vsel %vm1222, %v2251, 0
        %v2267 = vsel %vm1222, %v2252, 0
        %v2270 = vsel %vm1222, %v2253, 0
        %v2273 = vsel %vm1222, %v2254, 0
        %v2276 = vsel %vm1222, %v2255, 0
        %2278 = vmatprep.subr.mxu0 0.0
        %2279 = vmatpush1.msra.mxu0 %v2256
        %2280 = vmatprep.subr.mxu0 0.0
        %2281 = vmatpush1.msra.mxu0 %v2257
        %2282 = vmatprep.subr.mxu0 0.0
        %2283 = vmatpush1.msra.mxu0 %v2258
        %2284 = vmatprep.subr.mxu0 0.0
        %2285 = vmatpush1.msra.mxu0 %v2259
        %2286 = vmatprep.subr.mxu0 0.0
        %2287 = vmatpush1.msra.mxu0 0.0
        %2288 = vmatprep.subr.mxu0 0.0
        %2289 = vmatpush1.msra.mxu0 0.0
        %2290 = vmatprep.subr.mxu0 0.0
        %2291 = vmatpush1.msra.mxu0 0.0
        %2292 = vmatprep.subr.mxu0 0.0
        %2293 = vmatpush1.msra.mxu0 0.0
        %2294 = vmatprep.subr.mxu0 0.0
        %2295 = vmatpush1.msra.mxu0 0.0
        %2296 = vmatprep.subr.mxu0 0.0
        %2297 = vmatpush1.msra.mxu0 0.0
        %2298 = vmatprep.subr.mxu0 0.0
        %2299 = vmatpush1.msra.mxu0 0.0
        %2300 = vmatprep.subr.mxu0 0.0
        %2301 = vmatpush1.msra.mxu0 0.0
        %2302 = vmatprep.subr.mxu0 0.0
        %2303 = vmatpush1.msra.mxu0 0.0
        %2304 = vmatprep.subr.mxu0 0.0
        %2305 = vmatpush1.msra.mxu0 0.0
        %2306 = vmatprep.subr.mxu0 0.0
        %2307 = vmatpush1.msra.mxu0 0.0
        %2308 = vmatprep.subr.mxu0 0.0
        %2309 = vmatpush1.msra.mxu0 0.0
        %2310 = vmatprep.subr.mxu0 0.0
        %2311 = vmatpush1.msra.mxu0 0.0
        %2312 = vmatprep.subr.mxu0 0.0
        %2313 = vmatpush1.msra.mxu0 0.0
        %2314 = vmatprep.subr.mxu0 0.0
        %2315 = vmatpush1.msra.mxu0 0.0
        %2316 = vmatprep.subr.mxu0 0.0
        %2317 = vmatpush1.msra.mxu0 0.0
        %2318 = vmatprep.subr.mxu0 0.0
        %2319 = vmatpush1.msra.mxu0 0.0
        %2320 = vmatprep.subr.mxu0 0.0
        %2321 = vmatpush1.msra.mxu0 0.0
        %2322 = vmatprep.subr.mxu0 0.0
        %2323 = vmatpush1.msra.mxu0 0.0
        %2324 = vmatprep.subr.mxu0 0.0
        %2325 = vmatpush1.msra.mxu0 0.0
        %2326 = vmatprep.subr.mxu0 0.0
        %2327 = vmatpush1.msra.mxu0 0.0
        %2328 = vmatprep.subr.mxu0 0.0
        %2329 = vmatpush1.msra.mxu0 0.0
        %2330 = vmatprep.subr.mxu0 0.0
        %2331 = vmatpush1.msra.mxu0 0.0
        %2332 = vmatprep.subr.mxu0 0.0
        %2333 = vmatpush1.msra.mxu0 0.0
        %2334 = vmatprep.subr.mxu0 0.0
        %2335 = vmatpush1.msra.mxu0 0.0
        %2336 = vmatprep.subr.mxu0 0.0
        %2337 = vmatpush1.msra.mxu0 0.0
        %2338 = vmatprep.subr.mxu0 0.0
        %2339 = vmatpush1.msra.mxu0 0.0
        %2340 = vmatprep.subr.mxu0 0.0
        %2341 = vmatpush1.msra.mxu0 0.0
        %2342 = vmatprep.mubr.f32.mxu0 0.0
        %2343 = vmatmul.mubr.f32.gmra.mrb[0].mxu0 %v2261
        %v2344 = vpop.f32.mrb[0].mxu0
        %v2345 = vadd.f32 0.0, %v2344
        %v2346 = vpop.f32.mrb[0].mxu0
        %2347 = vmatprep.mubr.f32.mxu0 0.0
        %2348 = vmatmul.mubr.f32.gmra.mrb[0].mxu0 %v2264
        %v2349 = vpop.f32.mrb[0].mxu0
        %v2350 = vadd.f32 0.0, %v2349
        %v2351 = vpop.f32.mrb[0].mxu0
        %2352 = vmatprep.mubr.f32.mxu0 0.0
        %2353 = vmatmul.mubr.f32.gmra.mrb[0].mxu0 %v2267
        %v2354 = vpop.f32.mrb[0].mxu0
        %v2355 = vadd.f32 0.0, %v2354
        %v2356 = vpop.f32.mrb[0].mxu0
        %2357 = vmatprep.mubr.f32.mxu0 0.0
        %2358 = vmatmul.mubr.f32.gmra.mrb[0].mxu0 %v2270
        %v2359 = vpop.f32.mrb[0].mxu0
        %v2360 = vadd.f32 0.0, %v2359
        %v2361 = vpop.f32.mrb[0].mxu0
        %2362 = vmatprep.mubr.f32.mxu0 0.0
        %2363 = vmatmul.mubr.f32.gmra.mrb[0].mxu0 %v2273
        %v2364 = vpop.f32.mrb[0].mxu0
        %v2365 = vadd.f32 0.0, %v2364
        %v2366 = vpop.f32.mrb[0].mxu0
        %2367 = vmatprep.mubr.f32.mxu0 0.0
        %2368 = vmatmul.mubr.f32.gmra.mrb[0].mxu0 %v2276
        %v2369 = vpop.f32.mrb[0].mxu0
        %v2370 = vadd.f32 0.0, %v2369
        %v2371 = vpop.f32.mrb[0].mxu0
        %2372 = vdwg.mxu0
        %v2373 = vld [vmem:[%s12] sm:$0x1]
        %v2375 = vlaneseq
        %v2376 = vshrl.u32 %v2375, 7
        %v2377 = vsub.s32 0, %v2376
        %v2378 = vrot.slane %v2373, %v2377
        %v2380 = vadd.f32 %v2345, %v2378
        %v2381 = vadd.f32 %v2350, %v2378
        %v2382 = vadd.f32 %v2355, %v2378
        %v2383 = vadd.f32 %v2360, %v2378
        %v2384 = vadd.f32 %v2365, %v2378
        %v2385 = vadd.f32 %v2370, %v2378
        %v2386 = vsel %vm1361, %v2380, %v1663
        %v2387 = vsel %vm1362, %v2381, %v1668
        %v2388 = vsel %vm1363, %v2382, %v1673
        %v2389 = vsel %vm1361, %v2383, %v1678
        %v2390 = vsel %vm1362, %v2384, %v1683
        %v2391 = vsel %vm1363, %v2385, %v1688
        %v2392 = vadd.f32 %v2386, %v1804
        %v2393 = vadd.f32 %v2387, %v1804
        %v2394 = vadd.f32 %v2388, %v1804
        %v2395 = vadd.f32 %v2389, %v1805
        %v2396 = vadd.f32 %v2390, %v1805
        %v2397 = vadd.f32 %v2391, %v1805
        %v2398 = vmul.f32 %v1465, %v2392
        %v2399 = vmul.f32 %v1470, %v2393
        %v2400 = vmul.f32 %v1475, %v2394
        %v2401 = vmul.f32 %v1480, %v2395
        %v2402 = vmul.f32 %v1485, %v2396
        %v2403 = vmul.f32 %v1490, %v2397
        %v2404 = vld [vmem:[%s13] sm:$0xff]
        %v2405 = vld [vmem:[%s13 + $0x8] sm:$0xff]
        %v2406 = vld [vmem:[%s13 + $0x10] sm:$0xff]
        %v2407 = vld [vmem:[%s13 + $0x18] sm:$0xff]
        %v2409 = vsel %vm1222, %v2398, 0
        %v2412 = vsel %vm1222, %v2399, 0
        %v2415 = vsel %vm1222, %v2400, 0
        %v2418 = vsel %vm1222, %v2401, 0
        %v2421 = vsel %vm1222, %v2402, 0
        %v2424 = vsel %vm1222, %v2403, 0
        %2426 = vmatprep.subr.mxu0 0.0
        %2427 = vmatpush1.msra.mxu0 %v2404
        %2428 = vmatprep.subr.mxu0 0.0
        %2429 = vmatpush1.msra.mxu0 %v2405
        %2430 = vmatprep.subr.mxu0 0.0
        %2431 = vmatpush1.msra.mxu0 %v2406
        %2432 = vmatprep.subr.mxu0 0.0
        %2433 = vmatpush1.msra.mxu0 %v2407
        %2434 = vmatprep.subr.mxu0 0.0
        %2435 = vmatpush1.msra.mxu0 0.0
        %2436 = vmatprep.subr.mxu0 0.0
        %2437 = vmatpush1.msra.mxu0 0.0
        %2438 = vmatprep.subr.mxu0 0.0
        %2439 = vmatpush1.msra.mxu0 0.0
        %2440 = vmatprep.subr.mxu0 0.0
        %2441 = vmatpush1.msra.mxu0 0.0
        %2442 = vmatprep.subr.mxu0 0.0
        %2443 = vmatpush1.msra.mxu0 0.0
        %2444 = vmatprep.subr.mxu0 0.0
        %2445 = vmatpush1.msra.mxu0 0.0
        %2446 = vmatprep.subr.mxu0 0.0
        %2447 = vmatpush1.msra.mxu0 0.0
        %2448 = vmatprep.subr.mxu0 0.0
        %2449 = vmatpush1.msra.mxu0 0.0
        %2450 = vmatprep.subr.mxu0 0.0
        %2451 = vmatpush1.msra.mxu0 0.0
        %2452 = vmatprep.subr.mxu0 0.0
        %2453 = vmatpush1.msra.mxu0 0.0
        %2454 = vmatprep.subr.mxu0 0.0
        %2455 = vmatpush1.msra.mxu0 0.0
        %2456 = vmatprep.subr.mxu0 0.0
        %2457 = vmatpush1.msra.mxu0 0.0
        %2458 = vmatprep.subr.mxu0 0.0
        %2459 = vmatpush1.msra.mxu0 0.0
        %2460 = vmatprep.subr.mxu0 0.0
        %2461 = vmatpush1.msra.mxu0 0.0
        %2462 = vmatprep.subr.mxu0 0.0
        %2463 = vmatpush1.msra.mxu0 0.0
        %2464 = vmatprep.subr.mxu0 0.0
        %2465 = vmatpush1.msra.mxu0 0.0
        %2466 = vmatprep.subr.mxu0 0.0
        %2467 = vmatpush1.msra.mxu0 0.0
        %2468 = vmatprep.subr.mxu0 0.0
        %2469 = vmatpush1.msra.mxu0 0.0
        %2470 = vmatprep.subr.mxu0 0.0
        %2471 = vmatpush1.msra.mxu0 0.0
        %2472 = vmatprep.subr.mxu0 0.0
        %2473 = vmatpush1.msra.mxu0 0.0
        %2474 = vmatprep.subr.mxu0 0.0
        %2475 = vmatpush1.msra.mxu0 0.0
        %2476 = vmatprep.subr.mxu0 0.0
        %2477 = vmatpush1.msra.mxu0 0.0
        %2478 = vmatprep.subr.mxu0 0.0
        %2479 = vmatpush1.msra.mxu0 0.0
        %2480 = vmatprep.subr.mxu0 0.0
        %2481 = vmatpush1.msra.mxu0 0.0
        %2482 = vmatprep.subr.mxu0 0.0
        %2483 = vmatpush1.msra.mxu0 0.0
        %2484 = vmatprep.subr.mxu0 0.0
        %2485 = vmatpush1.msra.mxu0 0.0
        %2486 = vmatprep.subr.mxu0 0.0
        %2487 = vmatpush1.msra.mxu0 0.0
        %2488 = vmatprep.subr.mxu0 0.0
        %2489 = vmatpush1.msra.mxu0 0.0
        %2490 = vmatprep.mubr.f32.mxu0 0.0
        %2491 = vmatmul.mubr.f32.gmra.mrb[0].mxu0 %v2409
        %v2492 = vpop.f32.mrb[0].mxu0
        %v2493 = vadd.f32 0.0, %v2492
        %v2494 = vpop.f32.mrb[0].mxu0
        %2495 = vmatprep.mubr.f32.mxu0 0.0
        %2496 = vmatmul.mubr.f32.gmra.mrb[0].mxu0 %v2412
        %v2497 = vpop.f32.mrb[0].mxu0
        %v2498 = vadd.f32 0.0, %v2497
        %v2499 = vpop.f32.mrb[0].mxu0
        %2500 = vmatprep.mubr.f32.mxu0 0.0
        %2501 = vmatmul.mubr.f32.gmra.mrb[0].mxu0 %v2415
        %v2502 = vpop.f32.mrb[0].mxu0
        %v2503 = vadd.f32 0.0, %v2502
        %v2504 = vpop.f32.mrb[0].mxu0
        %2505 = vmatprep.mubr.f32.mxu0 0.0
        %2506 = vmatmul.mubr.f32.gmra.mrb[0].mxu0 %v2418
        %v2507 = vpop.f32.mrb[0].mxu0
        %v2508 = vadd.f32 0.0, %v2507
        %v2509 = vpop.f32.mrb[0].mxu0
        %2510 = vmatprep.mubr.f32.mxu0 0.0
        %2511 = vmatmul.mubr.f32.gmra.mrb[0].mxu0 %v2421
        %v2512 = vpop.f32.mrb[0].mxu0
        %v2513 = vadd.f32 0.0, %v2512
        %v2514 = vpop.f32.mrb[0].mxu0
        %2515 = vmatprep.mubr.f32.mxu0 0.0
        %2516 = vmatmul.mubr.f32.gmra.mrb[0].mxu0 %v2424
        %v2517 = vpop.f32.mrb[0].mxu0
        %v2518 = vadd.f32 0.0, %v2517
        %v2519 = vpop.f32.mrb[0].mxu0
        %2520 = vdwg.mxu0
        %v2521 = vld [vmem:[%s14] sm:$0x1]
        %v2523 = vlaneseq
        %v2524 = vshrl.u32 %v2523, 7
        %v2525 = vsub.s32 0, %v2524
        %v2526 = vrot.slane %v2521, %v2525
        %v2528 = vadd.f32 %v2493, %v2526
        %v2529 = vadd.f32 %v2498, %v2526
        %v2530 = vadd.f32 %v2503, %v2526
        %v2531 = vadd.f32 %v2508, %v2526
        %v2532 = vadd.f32 %v2513, %v2526
        %v2533 = vadd.f32 %v2518, %v2526
        %2534 = vst.msk [vmem:[%s530] sm:$0xff] %vm1222, %v2528
        %2535 = vst.msk [vmem:[%s530 + $0x8] sm:$0xff] %vm1222, %v2529
        %2536 = vst.msk [vmem:[%s530 + $0x10] sm:$0xff] %vm1222, %v2530
        %2537 = vst.msk [vmem:[%s530 + $0x18] sm:$0xff] %vm1222, %v2531
        %2538 = vst.msk [vmem:[%s530 + $0x20] sm:$0xff] %vm1222, %v2532
        %2539 = vst.msk [vmem:[%s530 + $0x28] sm:$0xff] %vm1222, %v2533
        %s2540 = sand.u32 %s359, 1
        %s2541 = scalar_lea.sflag [#allocation4], %s2540
        %s2542 = sand.u32 %s359, 1
        %s2543 = smul.addr %s2542, 48
        %s2544 = scalar_lea.vmem [#allocation8], %s2543
        // Predicated region
        $region93: #{tpu_custom_call.1} parent=79 // pred_check
          %p2545 = pneg %p369
        $region94: #{tpu_custom_call.1} parent=79 // pred_check_branch
          %2547 = sbr.rel (%p2545) target = $region96
        $region95: #{tpu_custom_call.1} parent=79 // pred_region
          %s2548 = smul.u32 2, %s31
          %s2550 = ssub.s32 768, 768
          %2551 = vsyncadd %s2541, %s2550
          %s2552 = smul.addr %s2548, 3
          %s2553 = smul.addr %s2552, 128
          %s2554 = scalar_lea.hbm %s15, %s2553
          %s2555 = sshll.u32 %s2544, 4
          %s2556 = int_to_ptr.vmem [resolvable:$true] %s2555
          %2561 = dma.vmem_to_hbm [thread:$0]  %s2556, 768, %s2554, %s2541, 128, 128, 8
        $region96: #{tpu_custom_call.1} parent=79 // pred_fallthru
          _
      $region80: #{tpu_custom_call.1} parent=5 // pred_fallthru
        _
      %p2562 = scmp.le.s32.totalorder 2, %s26
      // Predicated region
      $region97: #{tpu_custom_call.1} parent=5 // pred_check
        %p2563 = pneg %p2562
      $region98: #{tpu_custom_call.1} parent=5 // pred_check_branch
        %2565 = sbr.rel (%p2563) target = $region100
      $region99: #{tpu_custom_call.1} parent=5 // pred_region
        %s2566 = ssub.s32 %s26, 2
        // Predicated region
        $region101: #{tpu_custom_call.1} parent=99 // pred_check
          %p2567 = pneg %p375
        $region102: #{tpu_custom_call.1} parent=99 // pred_check_branch
          %2569 = sbr.rel (%p2567) target = $region104
        $region103: #{tpu_custom_call.1} parent=99 // pred_region
          %s2570 = sand.u32 %s360, 1
          %s2571 = scalar_lea.sflag [#allocation4], %s2570
          %s2572 = sand.u32 %s360, 1
          %s2573 = smul.addr %s2572, 48
          %s2574 = scalar_lea.vmem [#allocation8], %s2573
          %2575 = dma.done %s2571, 768
        $region104: #{tpu_custom_call.1} parent=99 // pred_fallthru
          _
      $region100: #{tpu_custom_call.1} parent=5 // pred_fallthru
        _
    $region6: #{tpu_custom_call.1} parent=1 // loop_footer
      %s30 = sadd.s32 1, %s26
    $region7: #{tpu_custom_call.1} parent=1 // loop_footer_branch
      %25 = sbr.rel target = $region3
    $region8: #{tpu_custom_call.1} parent=1 // loop_exit
      _
    %2576 = vsyncpa [#allocation3], 1
    %s2577 = scalar_lea.sflag [#allocation3], 1
    %2578 = vsyncpa %s2577, 1
    %2579 = vsyncpa [#allocation6], 1
    %2580 = vsyncpa [#allocation4], 1
    %s2581 = scalar_lea.sflag [#allocation4], 1
    %2582 = vsyncpa %s2581, 1

</llo_original>
